<compile_context>
chip_gen: v6e
topology: v6e:2x2x1
jax: 0.10.0
libtpu: 0.0.40
codegen_flags: <defaults>
</compile_context>

<pallas_src>
import jax
import jax.numpy as jnp
from jax.experimental import pallas as pl
from jax.experimental.pallas import tpu as pltpu

NUM_CLASSES = 10
LANE = 128
SUBLANE = 8


def _round_up(n, m):
    return ((n + m - 1) // m) * m


def _pad2d(a, rows, cols):
    return jnp.pad(a, ((0, rows - a.shape[0]), (0, cols - a.shape[1])))


# ------------------------------------------------------------------ kernels --

def conv_relu_pool_kernel(p_ref, w_ref, b_ref, o_ref):
    """Fused im2col-conv + bias + ReLU + 2x2 max-pool.

    p_ref: [4, M, K]  im2col patches, one slab per pooling phase (zero-padded)
    w_ref: [K, C]     conv weights as a GEMM matrix (zero-padded)
    b_ref: [1, C]     conv bias (zero-padded)
    o_ref: [M, C]     pooled activations (lane-dense)
    """
    w = w_ref[...]
    b = b_ref[...]
    out = None
    for phase in range(4):                       # static unroll: 4 MXU GEMMs
        h = jnp.dot(p_ref[phase], w, preferred_element_type=jnp.float32) + b
        h = jnp.maximum(h, 0.0)
        out = h if out is None else jnp.maximum(out, h)
    o_ref[...] = out.astype(o_ref.dtype)


def mlp_head_kernel(x_ref, w1_ref, b1_ref, w2_ref, b2_ref, w3_ref, b3_ref, o_ref):
    """fc1+ReLU -> fc2+ReLU -> fc3 -> log_softmax (padded class cols masked)."""
    h1 = jnp.dot(x_ref[...], w1_ref[...], preferred_element_type=jnp.float32)
    h1 = jnp.maximum(h1 + b1_ref[...], 0.0)
    h2 = jnp.dot(h1, w2_ref[...], preferred_element_type=jnp.float32)
    h2 = jnp.maximum(h2 + b2_ref[...], 0.0)
    logits = jnp.dot(h2, w3_ref[...], preferred_element_type=jnp.float32)
    logits = logits + b3_ref[...]
    lane = jax.lax.broadcasted_iota(jnp.int32, logits.shape, 1)
    logits = jnp.where(lane < NUM_CLASSES, logits, -1e30)
    m = jnp.max(logits, axis=-1, keepdims=True)
    z = logits - m
    lse = jnp.log(jnp.sum(jnp.exp(z), axis=-1, keepdims=True))
    o_ref[...] = (z - lse).astype(o_ref.dtype)


_VMEM = pl.BlockSpec(memory_space=pltpu.MemorySpace.VMEM)


# ----------------------------------------------------------------- wrappers --

def conv_relu_pool(x_nhwc, w_hwio, bias, k=5):
    """maxpool2x2(relu(conv_valid(x, w) + b)) via a single fused Pallas kernel."""
    B, H, W, Cin = x_nhwc.shape
    Cout = w_hwio.shape[-1]
    OH, OW = H - k + 1, W - k + 1
    PH, PW = OH // 2, OW // 2
    K = k * k * Cin
    Kp = _round_up(K, LANE)
    Cp = _round_up(Cout, LANE)
    Mp = B * PH * PW
    Mpad = _round_up(Mp, SUBLANE)

    # im2col patches, index order (kh, kw, cin) — matches w_hwio.reshape(K, Cout)
    cols = []
    for di in range(k):
        for dj in range(k):
            cols.append(x_nhwc[:, di:di + OH, dj:dj + OW, :])
    patches = jnp.concatenate(cols, axis=-1)          # [B, OH, OW, K]

    # group by 2x2 pooling phase -> [4, Mpad, Kp]
    phases = []
    for pi in range(2):
        for pj in range(2):
            p = patches[:, pi::2, pj::2, :].reshape(Mp, K)
            phases.append(_pad2d(p, Mpad, Kp))
    p4 = jnp.stack(phases, axis=0)

    wmat = _pad2d(w_hwio.reshape(K, Cout), Kp, Cp)
    bvec = _pad2d(bias.reshape(1, Cout), 1, Cp)

    out = pl.pallas_call(
        conv_relu_pool_kernel,
        out_shape=jax.ShapeDtypeStruct((Mpad, Cp), jnp.float32),
        in_specs=[_VMEM, _VMEM, _VMEM],
        out_specs=_VMEM,
    )(p4, wmat, bvec)
    return out[:Mp, :Cout].reshape(B, PH, PW, Cout)


def mlp_head(x_flat, w1, b1, w2, b2, w3, b3):
    Bn, Din = x_flat.shape
    Bp = _round_up(max(Bn, SUBLANE), SUBLANE)
    Dp = _round_up(Din, LANE)
    H1 = _round_up(w1.shape[1], LANE)
    H2 = _round_up(w2.shape[1], LANE)
    Cp = _round_up(w3.shape[1], LANE)

    out = pl.pallas_call(
        mlp_head_kernel,
        out_shape=jax.ShapeDtypeStruct((Bp, Cp), jnp.float32),
        in_specs=[_VMEM] * 7,
        out_specs=_VMEM,
    )(
        _pad2d(x_flat, Bp, Dp),
        _pad2d(w1, Dp, H1), _pad2d(b1.reshape(1, -1), 1, H1),
        _pad2d(w2, H1, H2), _pad2d(b2.reshape(1, -1), 1, H2),
        _pad2d(w3, H2, Cp), _pad2d(b3.reshape(1, -1), 1, Cp),
    )
    return out[:Bn, :w3.shape[1]]


def cnn_cifar_forward(x_nchw, params):
    x = jnp.transpose(x_nchw, (0, 2, 3, 1))                        # NCHW -> NHWC
    h = conv_relu_pool(x, params["conv1_w"], params["conv1_b"])    # [B,14,14,6]
    h = conv_relu_pool(h, params["conv2_w"], params["conv2_b"])    # [B,5,5,16]
    # PyTorch's x.view(-1, 16*5*5) flattens NCHW, i.e. channel-major order
    hf = jnp.transpose(h, (0, 3, 1, 2)).reshape(h.shape[0], -1)    # [B, 400]
    return mlp_head(hf, params["fc1_w"], params["fc1_b"],
                    params["fc2_w"], params["fc2_b"],
                    params["fc3_w"], params["fc3_b"])


# ---------------------------------------------------------------- reference --

def reference_forward(x_nchw, params):
    hp = jax.lax.Precision.HIGHEST
    x = jnp.transpose(x_nchw, (0, 2, 3, 1))

    def conv(x, w, b):
        y = jax.lax.conv_general_dilated(
            x, w, (1, 1), "VALID",
            dimension_numbers=("NHWC", "HWIO", "NHWC"), precision=hp)
        return jnp.maximum(y + b, 0.0)

    def pool(x):
        B, H, W, C = x.shape
        return x.reshape(B, H // 2, 2, W // 2, 2, C).max(axis=(2, 4))

    h = pool(conv(x, params["conv1_w"], params["conv1_b"]))
    h = pool(conv(h, params["conv2_w"], params["conv2_b"]))
    hf = jnp.transpose(h, (0, 3, 1, 2)).reshape(h.shape[0], -1)
    h1 = jnp.maximum(jnp.dot(hf, params["fc1_w"], precision=hp) + params["fc1_b"], 0.0)
    h2 = jnp.maximum(jnp.dot(h1, params["fc2_w"], precision=hp) + params["fc2_b"], 0.0)
    logits = jnp.dot(h2, params["fc3_w"], precision=hp) + params["fc3_b"]
    return jax.nn.log_softmax(logits, axis=-1)


if __name__ == "__main__":
    key = jax.random.PRNGKey(0)
    ks = jax.random.split(key, 11)
    B = 2
    x = jax.random.normal(ks[0], (B, 3, 32, 32), dtype=jnp.float32)

    params = {
        "conv1_w": jax.random.normal(ks[1], (5, 5, 3, 6), jnp.float32) * (2.0 / 75) ** 0.5,
        "conv1_b": jax.random.normal(ks[2], (6,), jnp.float32) * 0.01,
        "conv2_w": jax.random.normal(ks[3], (5, 5, 6, 16), jnp.float32) * (2.0 / 150) ** 0.5,
        "conv2_b": jax.random.normal(ks[4], (16,), jnp.float32) * 0.01,
        "fc1_w": jax.random.normal(ks[5], (400, 120), jnp.float32) * (2.0 / 400) ** 0.5,
        "fc1_b": jax.random.normal(ks[6], (120,), jnp.float32) * 0.01,
        "fc2_w": jax.random.normal(ks[7], (120, 84), jnp.float32) * (2.0 / 120) ** 0.5,
        "fc2_b": jax.random.normal(ks[8], (84,), jnp.float32) * 0.01,
        "fc3_w": jax.random.normal(ks[9], (84, NUM_CLASSES), jnp.float32) * (2.0 / 84) ** 0.5,
        "fc3_b": jax.random.normal(ks[10], (NUM_CLASSES,), jnp.float32) * 0.01,
    }

    out = jax.block_until_ready(cnn_cifar_forward(x, params))
    ref = reference_forward(x, params)

    assert out.shape == (B, NUM_CLASSES)
    assert jnp.allclose(out, ref, atol=2e-3, rtol=2e-3), float(jnp.max(jnp.abs(out - ref)))
    # rows are valid log-probabilities
    assert jnp.allclose(jnp.sum(jnp.exp(out), axis=-1), 1.0, atol=1e-4)

    print("KERNEL_OK")
</pallas_src>

<mosaic_0001>
module attributes {stable_mosaic.version = 11 : i64} {
  func.func @conv_relu_pool_kernel(%arg0: memref<4x392x128xf32, #tpu.memory_space<vmem>>, %arg1: memref<128x128xf32, #tpu.memory_space<vmem>>, %arg2: memref<1x128xf32, #tpu.memory_space<vmem>>, %arg3: memref<392x128xf32, #tpu.memory_space<vmem>>) attributes {dimension_semantics = [], scalar_prefetch = 0 : i64, scratch_operands = 0 : i64, tpu.core_type = #tpu.core_type<tc>} {
    %c0 = arith.constant 0 : index
    %c0_0 = arith.constant 0 : index
    %0 = vector.load %arg1[%c0, %c0_0] : memref<128x128xf32, #tpu.memory_space<vmem>>, vector<128x128xf32>
    %c0_1 = arith.constant 0 : index
    %c0_2 = arith.constant 0 : index
    %1 = vector.load %arg2[%c0_1, %c0_2] : memref<1x128xf32, #tpu.memory_space<vmem>>, vector<1x128xf32>
    %c0_3 = arith.constant 0 : index
    %c0_4 = arith.constant 0 : index
    %c0_5 = arith.constant 0 : index
    %2 = vector.load %arg0[%c0_3, %c0_4, %c0_5] : memref<4x392x128xf32, #tpu.memory_space<vmem>>, vector<1x392x128xf32>
    %3 = vector.shape_cast %2 : vector<1x392x128xf32> to vector<392x128xf32>
    %cst = arith.constant dense<0.000000e+00> : vector<392x128xf32>
    %4 = tpu.matmul %3, %0, %cst {dimension_numbers = #tpu.dot_dimension_numbers<[1], [0], [0], [1], [0, 0, 1, 1], [], []>} : vector<392x128xf32>, vector<128x128xf32>, vector<392x128xf32> -> vector<392x128xf32>
    %5 = vector.broadcast %1 : vector<1x128xf32> to vector<392x128xf32>
    %6 = arith.addf %4, %5 : vector<392x128xf32>
    %cst_6 = arith.constant 0.000000e+00 : f32
    %7 = vector.broadcast %cst_6 : f32 to vector<392x128xf32>
    %8 = arith.maximumf %6, %7 : vector<392x128xf32>
    %c1 = arith.constant 1 : index
    %c0_7 = arith.constant 0 : index
    %c0_8 = arith.constant 0 : index
    %9 = vector.load %arg0[%c1, %c0_7, %c0_8] : memref<4x392x128xf32, #tpu.memory_space<vmem>>, vector<1x392x128xf32>
    %10 = vector.shape_cast %9 : vector<1x392x128xf32> to vector<392x128xf32>
    %cst_9 = arith.constant dense<0.000000e+00> : vector<392x128xf32>
    %11 = tpu.matmul %10, %0, %cst_9 {dimension_numbers = #tpu.dot_dimension_numbers<[1], [0], [0], [1], [0, 0, 1, 1], [], []>} : vector<392x128xf32>, vector<128x128xf32>, vector<392x128xf32> -> vector<392x128xf32>
    %12 = vector.broadcast %1 : vector<1x128xf32> to vector<392x128xf32>
    %13 = arith.addf %11, %12 : vector<392x128xf32>
    %cst_10 = arith.constant 0.000000e+00 : f32
    %14 = vector.broadcast %cst_10 : f32 to vector<392x128xf32>
    %15 = arith.maximumf %13, %14 : vector<392x128xf32>
    %16 = arith.maximumf %8, %15 : vector<392x128xf32>
    %c2 = arith.constant 2 : index
    %c0_11 = arith.constant 0 : index
    %c0_12 = arith.constant 0 : index
    %17 = vector.load %arg0[%c2, %c0_11, %c0_12] : memref<4x392x128xf32, #tpu.memory_space<vmem>>, vector<1x392x128xf32>
    %18 = vector.shape_cast %17 : vector<1x392x128xf32> to vector<392x128xf32>
    %cst_13 = arith.constant dense<0.000000e+00> : vector<392x128xf32>
    %19 = tpu.matmul %18, %0, %cst_13 {dimension_numbers = #tpu.dot_dimension_numbers<[1], [0], [0], [1], [0, 0, 1, 1], [], []>} : vector<392x128xf32>, vector<128x128xf32>, vector<392x128xf32> -> vector<392x128xf32>
    %20 = vector.broadcast %1 : vector<1x128xf32> to vector<392x128xf32>
    %21 = arith.addf %19, %20 : vector<392x128xf32>
    %cst_14 = arith.constant 0.000000e+00 : f32
    %22 = vector.broadcast %cst_14 : f32 to vector<392x128xf32>
    %23 = arith.maximumf %21, %22 : vector<392x128xf32>
    %24 = arith.maximumf %16, %23 : vector<392x128xf32>
    %c3 = arith.constant 3 : index
    %c0_15 = arith.constant 0 : index
    %c0_16 = arith.constant 0 : index
    %25 = vector.load %arg0[%c3, %c0_15, %c0_16] : memref<4x392x128xf32, #tpu.memory_space<vmem>>, vector<1x392x128xf32>
    %26 = vector.shape_cast %25 : vector<1x392x128xf32> to vector<392x128xf32>
    %cst_17 = arith.constant dense<0.000000e+00> : vector<392x128xf32>
    %27 = tpu.matmul %26, %0, %cst_17 {dimension_numbers = #tpu.dot_dimension_numbers<[1], [0], [0], [1], [0, 0, 1, 1], [], []>} : vector<392x128xf32>, vector<128x128xf32>, vector<392x128xf32> -> vector<392x128xf32>
    %28 = vector.broadcast %1 : vector<1x128xf32> to vector<392x128xf32>
    %29 = arith.addf %27, %28 : vector<392x128xf32>
    %cst_18 = arith.constant 0.000000e+00 : f32
    %30 = vector.broadcast %cst_18 : f32 to vector<392x128xf32>
    %31 = arith.maximumf %29, %30 : vector<392x128xf32>
    %32 = arith.maximumf %24, %31 : vector<392x128xf32>
    %c0_19 = arith.constant 0 : index
    %c0_20 = arith.constant 0 : index
    %33 = vector.load %arg3[%c0_19, %c0_20] : memref<392x128xf32, #tpu.memory_space<vmem>>, vector<392x128xf32>
    tpu.vector_store %arg3[%c0_19, %c0_20], %32 {strides = array<i32>} : memref<392x128xf32, #tpu.memory_space<vmem>>, vector<392x128xf32>,
    return
  }
}

</mosaic_0001>

<llo_original>
// kernel: tpu_custom_call.1
$region0: #{tpu_custom_call.1}
  #allocation0 [shape = 'u32[]', space=smem, size = 0x4, offset = 0x4, fixed_abs, tag = 'smem constant byte address 0x4 - core index']
  #allocation1 [shape = 'u32[144,128]{1,0:T(1,128)}', space=vmem, size = 0x12000, scoped, tag = 'internal scratch']
  %s0 = inlined_call_operand.hbm [shape: f32[4,392,128], index: 0, kind: input, shape index: {}]
  %s1 = inlined_call_operand.hbm [shape: f32[128,128], index: 1, kind: input, shape index: {}]
  %s2 = inlined_call_operand.vmem [shape: f32[1,128], index: 2, kind: input, shape index: {}]
  %s3 = inlined_call_operand.hbm [shape: f32[392,128], index: 3, kind: output, shape index: {}]
  %s4 = sld [smem:[#allocation0]]
  $region30: #{tpu_custom_call.1} parent=0
    _
  %s6 = ssub.s32 1, %s4
  %s7 = scalar_select 0, %s6, %s4
  $region1: #{tpu_custom_call.1} parent=0
    #allocation2 [shape = 'u8[802816]{0}', space=vmem, size = 0xc4000, scoped, tag = 'input window, operand 0, single buffered']
    #allocation3 [shape = 's32[1]{0}', space=sflag, size = 0x4, scoped, tag = 'scoped memory for tpu_custom_call.1']
    #allocation4 [shape = 's32[1]{0}', space=sflag, size = 0x4, scoped, tag = 'scoped memory for tpu_custom_call.1']
    #allocation5 [shape = 'u8[65536]{0}', space=vmem, size = 0x10000, scoped, tag = 'input window, operand 1, single buffered']
    #allocation6 [shape = 's32[1]{0}', space=sflag, size = 0x4, scoped, tag = 'scoped memory for tpu_custom_call.1']
    #allocation7 [shape = 'u8[200704]{0}', space=vmem, size = 0x31000, scoped, tag = 'output window, operand 0, single buffered']
    %8 = vsyncpa [#allocation3], 0
    %9 = vsyncpa [#allocation6], 0
    %10 = vsyncpa [#allocation4], 0
    // Predicated region
    $region2: #{tpu_custom_call.1} parent=1 // pred_check
      _
    $region3: #{tpu_custom_call.1} parent=1 // pred_check_branch
      %12 = sbr.rel (0) target = $region5
    $region4: #{tpu_custom_call.1} parent=1 // pred_region
      %s14 = ssub.s32 25088, 25088
      %15 = vsyncadd [#allocation3], %s14
      %s16 = sshll.u32 [#allocation2], 4
      %s17 = int_to_ptr.vmem [resolvable:$true] %s16
      %22 = dma.hbm_to_vmem [thread:$0]  %s0, 25088, %s17, [#allocation3], 128, 128, 8
    $region5: #{tpu_custom_call.1} parent=1 // pred_fallthru
      _
    // Predicated region
    $region6: #{tpu_custom_call.1} parent=1 // pred_check
      _
    $region7: #{tpu_custom_call.1} parent=1 // pred_check_branch
      %24 = sbr.rel (0) target = $region9
    $region8: #{tpu_custom_call.1} parent=1 // pred_region
      %s26 = ssub.s32 2048, 2048
      %27 = vsyncadd [#allocation6], %s26
      %s28 = sshll.u32 [#allocation5], 4
      %s29 = int_to_ptr.vmem [resolvable:$true] %s28
      %34 = dma.hbm_to_vmem [thread:$0]  %s1, 2048, %s29, [#allocation6], 128, 128, 8
    $region9: #{tpu_custom_call.1} parent=1 // pred_fallthru
      _
    // Predicated region
    $region10: #{tpu_custom_call.1} parent=1 // pred_check
      _
    $region11: #{tpu_custom_call.1} parent=1 // pred_check_branch
      %36 = sbr.rel (0) target = $region13
    $region12: #{tpu_custom_call.1} parent=1 // pred_region
      _
    $region13: #{tpu_custom_call.1} parent=1 // pred_fallthru
      _
    // Predicated region
    $region14: #{tpu_custom_call.1} parent=1 // pred_check
      _
    $region15: #{tpu_custom_call.1} parent=1 // pred_check_branch
      %38 = sbr.rel (0) target = $region17
    $region16: #{tpu_custom_call.1} parent=1 // pred_region
      %39 = dma.done [#allocation3], 25088
    $region17: #{tpu_custom_call.1} parent=1 // pred_fallthru
      _
    // Predicated region
    $region18: #{tpu_custom_call.1} parent=1 // pred_check
      _
    $region19: #{tpu_custom_call.1} parent=1 // pred_check_branch
      %41 = sbr.rel (0) target = $region21
    $region20: #{tpu_custom_call.1} parent=1 // pred_region
      %42 = dma.done [#allocation6], 2048
    $region21: #{tpu_custom_call.1} parent=1 // pred_fallthru
      _
    %v43 = vld [vmem:[#allocation5] sm:$0xff]
    %v44 = vld [vmem:[#allocation5 + $0x8] sm:$0xff]
    %v45 = vld [vmem:[#allocation5 + $0x10] sm:$0xff]
    %v46 = vld [vmem:[#allocation5 + $0x18] sm:$0xff]
    %v47 = vld [vmem:[#allocation5 + $0x20] sm:$0xff]
    %v48 = vld [vmem:[#allocation5 + $0x28] sm:$0xff]
    %v49 = vld [vmem:[#allocation5 + $0x30] sm:$0xff]
    %v50 = vld [vmem:[#allocation5 + $0x38] sm:$0xff]
    %v51 = vld [vmem:[#allocation5 + $0x40] sm:$0xff]
    %v52 = vld [vmem:[#allocation5 + $0x48] sm:$0xff]
    %v53 = vld [vmem:[#allocation5 + $0x50] sm:$0xff]
    %v54 = vld [vmem:[#allocation5 + $0x58] sm:$0xff]
    %v55 = vld [vmem:[#allocation5 + $0x60] sm:$0xff]
    %v56 = vld [vmem:[#allocation5 + $0x68] sm:$0xff]
    %v57 = vld [vmem:[#allocation5 + $0x70] sm:$0xff]
    %v58 = vld [vmem:[#allocation5 + $0x78] sm:$0xff]
    %v59 = vld [vmem:[%s2] sm:$0x1]
    %v60 = vld [vmem:[#allocation2] sm:$0xff]
    %v61 = vld [vmem:[#allocation2 + $0x8] sm:$0xff]
    %v62 = vld [vmem:[#allocation2 + $0x10] sm:$0xff]
    %v63 = vld [vmem:[#allocation2 + $0x18] sm:$0xff]
    %v64 = vld [vmem:[#allocation2 + $0x20] sm:$0xff]
    %v65 = vld [vmem:[#allocation2 + $0x28] sm:$0xff]
    %v66 = vld [vmem:[#allocation2 + $0x30] sm:$0xff]
    %v67 = vld [vmem:[#allocation2 + $0x38] sm:$0xff]
    %v68 = vld [vmem:[#allocation2 + $0x40] sm:$0xff]
    %v69 = vld [vmem:[#allocation2 + $0x48] sm:$0xff]
    %v70 = vld [vmem:[#allocation2 + $0x50] sm:$0xff]
    %v71 = vld [vmem:[#allocation2 + $0x58] sm:$0xff]
    %v72 = vld [vmem:[#allocation2 + $0x60] sm:$0xff]
    %v73 = vld [vmem:[#allocation2 + $0x68] sm:$0xff]
    %v74 = vld [vmem:[#allocation2 + $0x70] sm:$0xff]
    %v75 = vld [vmem:[#allocation2 + $0x78] sm:$0xff]
    %v76 = vld [vmem:[#allocation2 + $0x80] sm:$0xff]
    %v77 = vld [vmem:[#allocation2 + $0x88] sm:$0xff]
    %v78 = vld [vmem:[#allocation2 + $0x90] sm:$0xff]
    %v79 = vld [vmem:[#allocation2 + $0x98] sm:$0xff]
    %v80 = vld [vmem:[#allocation2 + $0xa0] sm:$0xff]
    %v81 = vld [vmem:[#allocation2 + $0xa8] sm:$0xff]
    %v82 = vld [vmem:[#allocation2 + $0xb0] sm:$0xff]
    %v83 = vld [vmem:[#allocation2 + $0xb8] sm:$0xff]
    %v84 = vld [vmem:[#allocation2 + $0xc0] sm:$0xff]
    %v85 = vld [vmem:[#allocation2 + $0xc8] sm:$0xff]
    %v86 = vld [vmem:[#allocation2 + $0xd0] sm:$0xff]
    %v87 = vld [vmem:[#allocation2 + $0xd8] sm:$0xff]
    %v88 = vld [vmem:[#allocation2 + $0xe0] sm:$0xff]
    %v89 = vld [vmem:[#allocation2 + $0xe8] sm:$0xff]
    %v90 = vld [vmem:[#allocation2 + $0xf0] sm:$0xff]
    %v91 = vld [vmem:[#allocation2 + $0xf8] sm:$0xff]
    %v92 = vld [vmem:[#allocation2 + $0x100] sm:$0xff]
    %v93 = vld [vmem:[#allocation2 + $0x108] sm:$0xff]
    %v94 = vld [vmem:[#allocation2 + $0x110] sm:$0xff]
    %v95 = vld [vmem:[#allocation2 + $0x118] sm:$0xff]
    %v96 = vld [vmem:[#allocation2 + $0x120] sm:$0xff]
    %v97 = vld [vmem:[#allocation2 + $0x128] sm:$0xff]
    %v98 = vld [vmem:[#allocation2 + $0x130] sm:$0xff]
    %v99 = vld [vmem:[#allocation2 + $0x138] sm:$0xff]
    %v100 = vld [vmem:[#allocation2 + $0x140] sm:$0xff]
    %v101 = vld [vmem:[#allocation2 + $0x148] sm:$0xff]
    %v102 = vld [vmem:[#allocation2 + $0x150] sm:$0xff]
    %v103 = vld [vmem:[#allocation2 + $0x158] sm:$0xff]
    %v104 = vld [vmem:[#allocation2 + $0x160] sm:$0xff]
    %v105 = vld [vmem:[#allocation2 + $0x168] sm:$0xff]
    %v106 = vld [vmem:[#allocation2 + $0x170] sm:$0xff]
    %v107 = vld [vmem:[#allocation2 + $0x178] sm:$0xff]
    %v108 = vld [vmem:[#allocation2 + $0x180] sm:$0xff]
    %v110 = vlaneseq
    %v111 = vshrl.u32 %v110, 7
    %v112 = vsub.s32 0, %v111
    %v113 = vrot.slane %v59, %v112
    %115 = vmatprep.subr.mxu0 0.0
    %116 = vmatpush1.msra.mxu0 %v58
    %117 = vmatprep.subr.mxu0 0.0
    %118 = vmatpush1.msra.mxu0 %v57
    %119 = vmatprep.subr.mxu0 0.0
    %120 = vmatpush1.msra.mxu0 %v56
    %121 = vmatprep.subr.mxu0 0.0
    %122 = vmatpush1.msra.mxu0 %v55
    %123 = vmatprep.subr.mxu0 0.0
    %124 = vmatpush1.msra.mxu0 %v54
    %125 = vmatprep.subr.mxu0 0.0
    %126 = vmatpush1.msra.mxu0 %v53
    %127 = vmatprep.subr.mxu0 0.0
    %128 = vmatpush1.msra.mxu0 %v52
    %129 = vmatprep.subr.mxu0 0.0
    %130 = vmatpush1.msra.mxu0 %v51
    %131 = vmatprep.subr.mxu0 0.0
    %132 = vmatpush1.msra.mxu0 %v50
    %133 = vmatprep.subr.mxu0 0.0
    %134 = vmatpush1.msra.mxu0 %v49
    %135 = vmatprep.subr.mxu0 0.0
    %136 = vmatpush1.msra.mxu0 %v48
    %137 = vmatprep.subr.mxu0 0.0
    %138 = vmatpush1.msra.mxu0 %v47
    %139 = vmatprep.subr.mxu0 0.0
    %140 = vmatpush1.msra.mxu0 %v46
    %141 = vmatprep.subr.mxu0 0.0
    %142 = vmatpush1.msra.mxu0 %v45
    %143 = vmatprep.subr.mxu0 0.0
    %144 = vmatpush1.msra.mxu0 %v44
    %145 = vmatprep.subr.mxu0 0.0
    %146 = vmatpush1.msra.mxu0 %v43
    %147 = vmatprep.subr.mxu0 0.0
    %148 = vmatpush2.msra.mxu0 0.0
    %149 = vmatprep.subr.mxu0 0.0
    %150 = vmatpush2.msra.mxu0 0.0
    %151 = vmatprep.subr.mxu0 0.0
    %152 = vmatpush2.msra.mxu0 0.0
    %153 = vmatprep.subr.mxu0 0.0
    %154 = vmatpush2.msra.mxu0 0.0
    %155 = vmatprep.subr.mxu0 0.0
    %156 = vmatpush2.msra.mxu0 0.0
    %157 = vmatprep.subr.mxu0 0.0
    %158 = vmatpush2.msra.mxu0 0.0
    %159 = vmatprep.subr.mxu0 0.0
    %160 = vmatpush2.msra.mxu0 0.0
    %161 = vmatprep.subr.mxu0 0.0
    %162 = vmatpush2.msra.mxu0 0.0
    %163 = vmatprep.subr.mxu0 0.0
    %164 = vmatpush2.msra.mxu0 0.0
    %165 = vmatprep.subr.mxu0 0.0
    %166 = vmatpush2.msra.mxu0 0.0
    %167 = vmatprep.subr.mxu0 0.0
    %168 = vmatpush2.msra.mxu0 0.0
    %169 = vmatprep.subr.mxu0 0.0
    %170 = vmatpush2.msra.mxu0 0.0
    %171 = vmatprep.subr.mxu0 0.0
    %172 = vmatpush2.msra.mxu0 0.0
    %173 = vmatprep.subr.mxu0 0.0
    %174 = vmatpush2.msra.mxu0 0.0
    %175 = vmatprep.subr.mxu0 0.0
    %176 = vmatpush2.msra.mxu0 0.0
    %177 = vmatprep.subr.mxu0 0.0
    %178 = vmatpush2.msra.mxu0 0.0
    %179 = vmatprep.mubr.f32.mxu0 0.0
    %180 = vmatmul.mubr.f32.gmra.mxu0 %v60
    %v181 = vpop.f32.mrf.mxu0
    %v182 = vadd.f32 %v113, %v181
    %v183 = vpop.f32.mrf.mxu0
    %184 = vmatprep.mubr.f32.mxu0 0.0
    %185 = vmatmul.mubr.f32.gmra.mxu0 %v61
    %v186 = vpop.f32.mrf.mxu0
    %v187 = vadd.f32 %v113, %v186
    %v188 = vpop.f32.mrf.mxu0
    %189 = vmatprep.mubr.f32.mxu0 0.0
    %190 = vmatmul.mubr.f32.gmra.mxu0 %v62
    %v191 = vpop.f32.mrf.mxu0
    %v192 = vadd.f32 %v113, %v191
    %v193 = vpop.f32.mrf.mxu0
    %194 = vmatprep.mubr.f32.mxu0 0.0
    %195 = vmatmul.mubr.f32.gmra.mxu0 %v63
    %v196 = vpop.f32.mrf.mxu0
    %v197 = vadd.f32 %v113, %v196
    %v198 = vpop.f32.mrf.mxu0
    %199 = vmatprep.mubr.f32.mxu0 0.0
    %200 = vmatmul.mubr.f32.gmra.mxu0 %v64
    %v201 = vpop.f32.mrf.mxu0
    %v202 = vadd.f32 %v113, %v201
    %v203 = vpop.f32.mrf.mxu0
    %204 = vmatprep.mubr.f32.mxu0 0.0
    %205 = vmatmul.mubr.f32.gmra.mxu0 %v65
    %v206 = vpop.f32.mrf.mxu0
    %v207 = vadd.f32 %v113, %v206
    %v208 = vpop.f32.mrf.mxu0
    %209 = vmatprep.mubr.f32.mxu0 0.0
    %210 = vmatmul.mubr.f32.gmra.mxu0 %v66
    %v211 = vpop.f32.mrf.mxu0
    %v212 = vadd.f32 %v113, %v211
    %v213 = vpop.f32.mrf.mxu0
    %214 = vmatprep.mubr.f32.mxu0 0.0
    %215 = vmatmul.mubr.f32.gmra.mxu0 %v67
    %v216 = vpop.f32.mrf.mxu0
    %v217 = vadd.f32 %v113, %v216
    %v218 = vpop.f32.mrf.mxu0
    %219 = vmatprep.mubr.f32.mxu0 0.0
    %220 = vmatmul.mubr.f32.gmra.mxu0 %v68
    %v221 = vpop.f32.mrf.mxu0
    %v222 = vadd.f32 %v113, %v221
    %v223 = vpop.f32.mrf.mxu0
    %224 = vmatprep.mubr.f32.mxu0 0.0
    %225 = vmatmul.mubr.f32.gmra.mxu0 %v69
    %v226 = vpop.f32.mrf.mxu0
    %v227 = vadd.f32 %v113, %v226
    %v228 = vpop.f32.mrf.mxu0
    %229 = vmatprep.mubr.f32.mxu0 0.0
    %230 = vmatmul.mubr.f32.gmra.mxu0 %v70
    %v231 = vpop.f32.mrf.mxu0
    %v232 = vadd.f32 %v113, %v231
    %v233 = vpop.f32.mrf.mxu0
    %234 = vmatprep.mubr.f32.mxu0 0.0
    %235 = vmatmul.mubr.f32.gmra.mxu0 %v71
    %v236 = vpop.f32.mrf.mxu0
    %v237 = vadd.f32 %v113, %v236
    %v238 = vpop.f32.mrf.mxu0
    %239 = vmatprep.mubr.f32.mxu0 0.0
    %240 = vmatmul.mubr.f32.gmra.mxu0 %v72
    %v241 = vpop.f32.mrf.mxu0
    %v242 = vadd.f32 %v113, %v241
    %v243 = vpop.f32.mrf.mxu0
    %244 = vmatprep.mubr.f32.mxu0 0.0
    %245 = vmatmul.mubr.f32.gmra.mxu0 %v73
    %v246 = vpop.f32.mrf.mxu0
    %v247 = vadd.f32 %v113, %v246
    %v248 = vpop.f32.mrf.mxu0
    %249 = vmatprep.mubr.f32.mxu0 0.0
    %250 = vmatmul.mubr.f32.gmra.mxu0 %v74
    %v251 = vpop.f32.mrf.mxu0
    %v252 = vadd.f32 %v113, %v251
    %v253 = vpop.f32.mrf.mxu0
    %254 = vmatprep.mubr.f32.mxu0 0.0
    %255 = vmatmul.mubr.f32.gmra.mxu0 %v75
    %v256 = vpop.f32.mrf.mxu0
    %v257 = vadd.f32 %v113, %v256
    %v258 = vpop.f32.mrf.mxu0
    %259 = vmatprep.mubr.f32.mxu0 0.0
    %260 = vmatmul.mubr.f32.gmra.mxu0 %v76
    %v261 = vpop.f32.mrf.mxu0
    %v262 = vadd.f32 %v113, %v261
    %v263 = vpop.f32.mrf.mxu0
    %264 = vmatprep.mubr.f32.mxu0 0.0
    %265 = vmatmul.mubr.f32.gmra.mxu0 %v77
    %v266 = vpop.f32.mrf.mxu0
    %v267 = vadd.f32 %v113, %v266
    %v268 = vpop.f32.mrf.mxu0
    %269 = vmatprep.mubr.f32.mxu0 0.0
    %270 = vmatmul.mubr.f32.gmra.mxu0 %v78
    %v271 = vpop.f32.mrf.mxu0
    %v272 = vadd.f32 %v113, %v271
    %v273 = vpop.f32.mrf.mxu0
    %274 = vmatprep.mubr.f32.mxu0 0.0
    %275 = vmatmul.mubr.f32.gmra.mxu0 %v79
    %v276 = vpop.f32.mrf.mxu0
    %v277 = vadd.f32 %v113, %v276
    %v278 = vpop.f32.mrf.mxu0
    %279 = vmatprep.mubr.f32.mxu0 0.0
    %280 = vmatmul.mubr.f32.gmra.mxu0 %v80
    %v281 = vpop.f32.mrf.mxu0
    %v282 = vadd.f32 %v113, %v281
    %v283 = vpop.f32.mrf.mxu0
    %284 = vmatprep.mubr.f32.mxu0 0.0
    %285 = vmatmul.mubr.f32.gmra.mxu0 %v81
    %v286 = vpop.f32.mrf.mxu0
    %v287 = vadd.f32 %v113, %v286
    %v288 = vpop.f32.mrf.mxu0
    %289 = vmatprep.mubr.f32.mxu0 0.0
    %290 = vmatmul.mubr.f32.gmra.mxu0 %v82
    %v291 = vpop.f32.mrf.mxu0
    %v292 = vadd.f32 %v113, %v291
    %v293 = vpop.f32.mrf.mxu0
    %294 = vmatprep.mubr.f32.mxu0 0.0
    %295 = vmatmul.mubr.f32.gmra.mxu0 %v83
    %v296 = vpop.f32.mrf.mxu0
    %v297 = vadd.f32 %v113, %v296
    %v298 = vpop.f32.mrf.mxu0
    %299 = vmatprep.mubr.f32.mxu0 0.0
    %300 = vmatmul.mubr.f32.gmra.mxu0 %v84
    %v301 = vpop.f32.mrf.mxu0
    %v302 = vadd.f32 %v113, %v301
    %v303 = vpop.f32.mrf.mxu0
    %304 = vmatprep.mubr.f32.mxu0 0.0
    %305 = vmatmul.mubr.f32.gmra.mxu0 %v85
    %v306 = vpop.f32.mrf.mxu0
    %v307 = vadd.f32 %v113, %v306
    %v308 = vpop.f32.mrf.mxu0
    %309 = vmatprep.mubr.f32.mxu0 0.0
    %310 = vmatmul.mubr.f32.gmra.mxu0 %v86
    %v311 = vpop.f32.mrf.mxu0
    %v312 = vadd.f32 %v113, %v311
    %v313 = vpop.f32.mrf.mxu0
    %314 = vmatprep.mubr.f32.mxu0 0.0
    %315 = vmatmul.mubr.f32.gmra.mxu0 %v87
    %v316 = vpop.f32.mrf.mxu0
    %v317 = vadd.f32 %v113, %v316
    %v318 = vpop.f32.mrf.mxu0
    %319 = vmatprep.mubr.f32.mxu0 0.0
    %320 = vmatmul.mubr.f32.gmra.mxu0 %v88
    %v321 = vpop.f32.mrf.mxu0
    %v322 = vadd.f32 %v113, %v321
    %v323 = vpop.f32.mrf.mxu0
    %324 = vmatprep.mubr.f32.mxu0 0.0
    %325 = vmatmul.mubr.f32.gmra.mxu0 %v89
    %v326 = vpop.f32.mrf.mxu0
    %v327 = vadd.f32 %v113, %v326
    %v328 = vpop.f32.mrf.mxu0
    %329 = vmatprep.mubr.f32.mxu0 0.0
    %330 = vmatmul.mubr.f32.gmra.mxu0 %v90
    %v331 = vpop.f32.mrf.mxu0
    %v332 = vadd.f32 %v113, %v331
    %v333 = vpop.f32.mrf.mxu0
    %334 = vmatprep.mubr.f32.mxu0 0.0
    %335 = vmatmul.mubr.f32.gmra.mxu0 %v91
    %v336 = vpop.f32.mrf.mxu0
    %v337 = vadd.f32 %v113, %v336
    %v338 = vpop.f32.mrf.mxu0
    %339 = vmatprep.mubr.f32.mxu0 0.0
    %340 = vmatmul.mubr.f32.gmra.mxu0 %v92
    %v341 = vpop.f32.mrf.mxu0
    %v342 = vadd.f32 %v113, %v341
    %v343 = vpop.f32.mrf.mxu0
    %344 = vmatprep.mubr.f32.mxu0 0.0
    %345 = vmatmul.mubr.f32.gmra.mxu0 %v93
    %v346 = vpop.f32.mrf.mxu0
    %v347 = vadd.f32 %v113, %v346
    %v348 = vpop.f32.mrf.mxu0
    %349 = vmatprep.mubr.f32.mxu0 0.0
    %350 = vmatmul.mubr.f32.gmra.mxu0 %v94
    %v351 = vpop.f32.mrf.mxu0
    %v352 = vadd.f32 %v113, %v351
    %v353 = vpop.f32.mrf.mxu0
    %354 = vmatprep.mubr.f32.mxu0 0.0
    %355 = vmatmul.mubr.f32.gmra.mxu0 %v95
    %v356 = vpop.f32.mrf.mxu0
    %v357 = vadd.f32 %v113, %v356
    %v358 = vpop.f32.mrf.mxu0
    %359 = vmatprep.mubr.f32.mxu0 0.0
    %360 = vmatmul.mubr.f32.gmra.mxu0 %v96
    %v361 = vpop.f32.mrf.mxu0
    %v362 = vadd.f32 %v113, %v361
    %v363 = vpop.f32.mrf.mxu0
    %364 = vmatprep.mubr.f32.mxu0 0.0
    %365 = vmatmul.mubr.f32.gmra.mxu0 %v97
    %v366 = vpop.f32.mrf.mxu0
    %v367 = vadd.f32 %v113, %v366
    %v368 = vpop.f32.mrf.mxu0
    %369 = vmatprep.mubr.f32.mxu0 0.0
    %370 = vmatmul.mubr.f32.gmra.mxu0 %v98
    %v371 = vpop.f32.mrf.mxu0
    %v372 = vadd.f32 %v113, %v371
    %v373 = vpop.f32.mrf.mxu0
    %374 = vmatprep.mubr.f32.mxu0 0.0
    %375 = vmatmul.mubr.f32.gmra.mxu0 %v99
    %v376 = vpop.f32.mrf.mxu0
    %v377 = vadd.f32 %v113, %v376
    %v378 = vpop.f32.mrf.mxu0
    %379 = vmatprep.mubr.f32.mxu0 0.0
    %380 = vmatmul.mubr.f32.gmra.mxu0 %v100
    %v381 = vpop.f32.mrf.mxu0
    %v382 = vadd.f32 %v113, %v381
    %v383 = vpop.f32.mrf.mxu0
    %384 = vmatprep.mubr.f32.mxu0 0.0
    %385 = vmatmul.mubr.f32.gmra.mxu0 %v101
    %v386 = vpop.f32.mrf.mxu0
    %v387 = vadd.f32 %v113, %v386
    %v388 = vpop.f32.mrf.mxu0
    %389 = vmatprep.mubr.f32.mxu0 0.0
    %390 = vmatmul.mubr.f32.gmra.mxu0 %v102
    %v391 = vpop.f32.mrf.mxu0
    %v392 = vadd.f32 %v113, %v391
    %v393 = vpop.f32.mrf.mxu0
    %394 = vmatprep.mubr.f32.mxu0 0.0
    %395 = vmatmul.mubr.f32.gmra.mxu0 %v103
    %v396 = vpop.f32.mrf.mxu0
    %v397 = vadd.f32 %v113, %v396
    %v398 = vpop.f32.mrf.mxu0
    %399 = vmatprep.mubr.f32.mxu0 0.0
    %400 = vmatmul.mubr.f32.gmra.mxu0 %v104
    %v401 = vpop.f32.mrf.mxu0
    %v402 = vadd.f32 %v113, %v401
    %v403 = vpop.f32.mrf.mxu0
    %404 = vmatprep.mubr.f32.mxu0 0.0
    %405 = vmatmul.mubr.f32.gmra.mxu0 %v105
    %v406 = vpop.f32.mrf.mxu0
    %v407 = vadd.f32 %v113, %v406
    %v408 = vpop.f32.mrf.mxu0
    %409 = vmatprep.mubr.f32.mxu0 0.0
    %410 = vmatmul.mubr.f32.gmra.mxu0 %v106
    %v411 = vpop.f32.mrf.mxu0
    %v412 = vadd.f32 %v113, %v411
    %v413 = vpop.f32.mrf.mxu0
    %414 = vmatprep.mubr.f32.mxu0 0.0
    %415 = vmatmul.mubr.f32.gmra.mxu0 %v107
    %v416 = vpop.f32.mrf.mxu0
    %v417 = vadd.f32 %v113, %v416
    %v418 = vpop.f32.mrf.mxu0
    %419 = vmatprep.mubr.f32.mxu0 0.0
    %420 = vmatmul.mubr.f32.gmra.mxu0 %v108
    %v421 = vpop.f32.mrf.mxu0
    %v422 = vadd.f32 %v113, %v421
    %v423 = vpop.f32.mrf.mxu0
    %424 = vdwg.mxu0
    %v425 = vmax.f32 %v182, 0.0
    %v426 = vmax.f32 %v187, 0.0
    %v427 = vmax.f32 %v192, 0.0
    %v428 = vmax.f32 %v197, 0.0
    %v429 = vmax.f32 %v202, 0.0
    %v430 = vmax.f32 %v207, 0.0
    %v431 = vmax.f32 %v212, 0.0
    %v432 = vmax.f32 %v217, 0.0
    %v433 = vmax.f32 %v222, 0.0
    %v434 = vmax.f32 %v227, 0.0
    %v435 = vmax.f32 %v232, 0.0
    %v436 = vmax.f32 %v237, 0.0
    %v437 = vmax.f32 %v242, 0.0
    %v438 = vmax.f32 %v247, 0.0
    %v439 = vmax.f32 %v252, 0.0
    %v440 = vmax.f32 %v257, 0.0
    %v441 = vmax.f32 %v262, 0.0
    %v442 = vmax.f32 %v267, 0.0
    %v443 = vmax.f32 %v272, 0.0
    %v444 = vmax.f32 %v277, 0.0
    %v445 = vmax.f32 %v282, 0.0
    %v446 = vmax.f32 %v287, 0.0
    %v447 = vmax.f32 %v292, 0.0
    %v448 = vmax.f32 %v297, 0.0
    %v449 = vmax.f32 %v302, 0.0
    %v450 = vmax.f32 %v307, 0.0
    %v451 = vmax.f32 %v312, 0.0
    %v452 = vmax.f32 %v317, 0.0
    %v453 = vmax.f32 %v322, 0.0
    %v454 = vmax.f32 %v327, 0.0
    %v455 = vmax.f32 %v332, 0.0
    %v456 = vmax.f32 %v337, 0.0
    %v457 = vmax.f32 %v342, 0.0
    %v458 = vmax.f32 %v347, 0.0
    %v459 = vmax.f32 %v352, 0.0
    %v460 = vmax.f32 %v357, 0.0
    %v461 = vmax.f32 %v362, 0.0
    %v462 = vmax.f32 %v367, 0.0
    %v463 = vmax.f32 %v372, 0.0
    %v464 = vmax.f32 %v377, 0.0
    %v465 = vmax.f32 %v382, 0.0
    %v466 = vmax.f32 %v387, 0.0
    %v467 = vmax.f32 %v392, 0.0
    %v468 = vmax.f32 %v397, 0.0
    %v469 = vmax.f32 %v402, 0.0
    %v470 = vmax.f32 %v407, 0.0
    %v471 = vmax.f32 %v412, 0.0
    %v472 = vmax.f32 %v417, 0.0
    %v473 = vmax.f32 %v422, 0.0
    %s474 = scalar_lea.vmem [#allocation2], 392
    %v475 = vld [vmem:[%s474] sm:$0xff]
    %v476 = vld [vmem:[%s474 + $0x8] sm:$0xff]
    %v477 = vld [vmem:[%s474 + $0x10] sm:$0xff]
    %v478 = vld [vmem:[%s474 + $0x18] sm:$0xff]
    %v479 = vld [vmem:[%s474 + $0x20] sm:$0xff]
    %v480 = vld [vmem:[%s474 + $0x28] sm:$0xff]
    %v481 = vld [vmem:[%s474 + $0x30] sm:$0xff]
    %v482 = vld [vmem:[%s474 + $0x38] sm:$0xff]
    %v483 = vld [vmem:[%s474 + $0x40] sm:$0xff]
    %v484 = vld [vmem:[%s474 + $0x48] sm:$0xff]
    %v485 = vld [vmem:[%s474 + $0x50] sm:$0xff]
    %v486 = vld [vmem:[%s474 + $0x58] sm:$0xff]
    %v487 = vld [vmem:[%s474 + $0x60] sm:$0xff]
    %v488 = vld [vmem:[%s474 + $0x68] sm:$0xff]
    %v489 = vld [vmem:[%s474 + $0x70] sm:$0xff]
    %v490 = vld [vmem:[%s474 + $0x78] sm:$0xff]
    %v491 = vld [vmem:[%s474 + $0x80] sm:$0xff]
    %v492 = vld [vmem:[%s474 + $0x88] sm:$0xff]
    %v493 = vld [vmem:[%s474 + $0x90] sm:$0xff]
    %v494 = vld [vmem:[%s474 + $0x98] sm:$0xff]
    %v495 = vld [vmem:[%s474 + $0xa0] sm:$0xff]
    %v496 = vld [vmem:[%s474 + $0xa8] sm:$0xff]
    %v497 = vld [vmem:[%s474 + $0xb0] sm:$0xff]
    %v498 = vld [vmem:[%s474 + $0xb8] sm:$0xff]
    %v499 = vld [vmem:[%s474 + $0xc0] sm:$0xff]
    %v500 = vld [vmem:[%s474 + $0xc8] sm:$0xff]
    %v501 = vld [vmem:[%s474 + $0xd0] sm:$0xff]
    %v502 = vld [vmem:[%s474 + $0xd8] sm:$0xff]
    %v503 = vld [vmem:[%s474 + $0xe0] sm:$0xff]
    %v504 = vld [vmem:[%s474 + $0xe8] sm:$0xff]
    %v505 = vld [vmem:[%s474 + $0xf0] sm:$0xff]
    %v506 = vld [vmem:[%s474 + $0xf8] sm:$0xff]
    %v507 = vld [vmem:[%s474 + $0x100] sm:$0xff]
    %v508 = vld [vmem:[%s474 + $0x108] sm:$0xff]
    %v509 = vld [vmem:[%s474 + $0x110] sm:$0xff]
    %v510 = vld [vmem:[%s474 + $0x118] sm:$0xff]
    %v511 = vld [vmem:[%s474 + $0x120] sm:$0xff]
    %v512 = vld [vmem:[%s474 + $0x128] sm:$0xff]
    %v513 = vld [vmem:[%s474 + $0x130] sm:$0xff]
    %v514 = vld [vmem:[%s474 + $0x138] sm:$0xff]
    %v515 = vld [vmem:[%s474 + $0x140] sm:$0xff]
    %v516 = vld [vmem:[%s474 + $0x148] sm:$0xff]
    %v517 = vld [vmem:[%s474 + $0x150] sm:$0xff]
    %v518 = vld [vmem:[%s474 + $0x158] sm:$0xff]
    %v519 = vld [vmem:[%s474 + $0x160] sm:$0xff]
    %v520 = vld [vmem:[%s474 + $0x168] sm:$0xff]
    %v521 = vld [vmem:[%s474 + $0x170] sm:$0xff]
    %v522 = vld [vmem:[%s474 + $0x178] sm:$0xff]
    %v523 = vld [vmem:[%s474 + $0x180] sm:$0xff]
    %524 = vmatprep.subr.mxu0 0.0
    %525 = vmatpush1.msra.mxu0 %v58
    %526 = vmatprep.subr.mxu0 0.0
    %527 = vmatpush1.msra.mxu0 %v57
    %528 = vmatprep.subr.mxu0 0.0
    %529 = vmatpush1.msra.mxu0 %v56
    %530 = vmatprep.subr.mxu0 0.0
    %531 = vmatpush1.msra.mxu0 %v55
    %532 = vmatprep.subr.mxu0 0.0
    %533 = vmatpush1.msra.mxu0 %v54
    %534 = vmatprep.subr.mxu0 0.0
    %535 = vmatpush1.msra.mxu0 %v53
    %536 = vmatprep.subr.mxu0 0.0
    %537 = vmatpush1.msra.mxu0 %v52
    %538 = vmatprep.subr.mxu0 0.0
    %539 = vmatpush1.msra.mxu0 %v51
    %540 = vmatprep.subr.mxu0 0.0
    %541 = vmatpush1.msra.mxu0 %v50
    %542 = vmatprep.subr.mxu0 0.0
    %543 = vmatpush1.msra.mxu0 %v49
    %544 = vmatprep.subr.mxu0 0.0
    %545 = vmatpush1.msra.mxu0 %v48
    %546 = vmatprep.subr.mxu0 0.0
    %547 = vmatpush1.msra.mxu0 %v47
    %548 = vmatprep.subr.mxu0 0.0
    %549 = vmatpush1.msra.mxu0 %v46
    %550 = vmatprep.subr.mxu0 0.0
    %551 = vmatpush1.msra.mxu0 %v45
    %552 = vmatprep.subr.mxu0 0.0
    %553 = vmatpush1.msra.mxu0 %v44
    %554 = vmatprep.subr.mxu0 0.0
    %555 = vmatpush1.msra.mxu0 %v43
    %556 = vmatprep.subr.mxu0 0.0
    %557 = vmatpush2.msra.mxu0 0.0
    %558 = vmatprep.subr.mxu0 0.0
    %559 = vmatpush2.msra.mxu0 0.0
    %560 = vmatprep.subr.mxu0 0.0
    %561 = vmatpush2.msra.mxu0 0.0
    %562 = vmatprep.subr.mxu0 0.0
    %563 = vmatpush2.msra.mxu0 0.0
    %564 = vmatprep.subr.mxu0 0.0
    %565 = vmatpush2.msra.mxu0 0.0
    %566 = vmatprep.subr.mxu0 0.0
    %567 = vmatpush2.msra.mxu0 0.0
    %568 = vmatprep.subr.mxu0 0.0
    %569 = vmatpush2.msra.mxu0 0.0
    %570 = vmatprep.subr.mxu0 0.0
    %571 = vmatpush2.msra.mxu0 0.0
    %572 = vmatprep.subr.mxu0 0.0
    %573 = vmatpush2.msra.mxu0 0.0
    %574 = vmatprep.subr.mxu0 0.0
    %575 = vmatpush2.msra.mxu0 0.0
    %576 = vmatprep.subr.mxu0 0.0
    %577 = vmatpush2.msra.mxu0 0.0
    %578 = vmatprep.subr.mxu0 0.0
    %579 = vmatpush2.msra.mxu0 0.0
    %580 = vmatprep.subr.mxu0 0.0
    %581 = vmatpush2.msra.mxu0 0.0
    %582 = vmatprep.subr.mxu0 0.0
    %583 = vmatpush2.msra.mxu0 0.0
    %584 = vmatprep.subr.mxu0 0.0
    %585 = vmatpush2.msra.mxu0 0.0
    %586 = vmatprep.subr.mxu0 0.0
    %587 = vmatpush2.msra.mxu0 0.0
    %588 = vmatprep.mubr.f32.mxu0 0.0
    %589 = vmatmul.mubr.f32.gmra.mxu0 %v475
    %v590 = vpop.f32.mrf.mxu0
    %v591 = vadd.f32 %v113, %v590
    %v592 = vpop.f32.mrf.mxu0
    %593 = vmatprep.mubr.f32.mxu0 0.0
    %594 = vmatmul.mubr.f32.gmra.mxu0 %v476
    %v595 = vpop.f32.mrf.mxu0
    %v596 = vadd.f32 %v113, %v595
    %v597 = vpop.f32.mrf.mxu0
    %598 = vmatprep.mubr.f32.mxu0 0.0
    %599 = vmatmul.mubr.f32.gmra.mxu0 %v477
    %v600 = vpop.f32.mrf.mxu0
    %v601 = vadd.f32 %v113, %v600
    %v602 = vpop.f32.mrf.mxu0
    %603 = vmatprep.mubr.f32.mxu0 0.0
    %604 = vmatmul.mubr.f32.gmra.mxu0 %v478
    %v605 = vpop.f32.mrf.mxu0
    %v606 = vadd.f32 %v113, %v605
    %v607 = vpop.f32.mrf.mxu0
    %608 = vmatprep.mubr.f32.mxu0 0.0
    %609 = vmatmul.mubr.f32.gmra.mxu0 %v479
    %v610 = vpop.f32.mrf.mxu0
    %v611 = vadd.f32 %v113, %v610
    %v612 = vpop.f32.mrf.mxu0
    %613 = vmatprep.mubr.f32.mxu0 0.0
    %614 = vmatmul.mubr.f32.gmra.mxu0 %v480
    %v615 = vpop.f32.mrf.mxu0
    %v616 = vadd.f32 %v113, %v615
    %v617 = vpop.f32.mrf.mxu0
    %618 = vmatprep.mubr.f32.mxu0 0.0
    %619 = vmatmul.mubr.f32.gmra.mxu0 %v481
    %v620 = vpop.f32.mrf.mxu0
    %v621 = vadd.f32 %v113, %v620
    %v622 = vpop.f32.mrf.mxu0
    %623 = vmatprep.mubr.f32.mxu0 0.0
    %624 = vmatmul.mubr.f32.gmra.mxu0 %v482
    %v625 = vpop.f32.mrf.mxu0
    %v626 = vadd.f32 %v113, %v625
    %v627 = vpop.f32.mrf.mxu0
    %628 = vmatprep.mubr.f32.mxu0 0.0
    %629 = vmatmul.mubr.f32.gmra.mxu0 %v483
    %v630 = vpop.f32.mrf.mxu0
    %v631 = vadd.f32 %v113, %v630
    %v632 = vpop.f32.mrf.mxu0
    %633 = vmatprep.mubr.f32.mxu0 0.0
    %634 = vmatmul.mubr.f32.gmra.mxu0 %v484
    %v635 = vpop.f32.mrf.mxu0
    %v636 = vadd.f32 %v113, %v635
    %v637 = vpop.f32.mrf.mxu0
    %638 = vmatprep.mubr.f32.mxu0 0.0
    %639 = vmatmul.mubr.f32.gmra.mxu0 %v485
    %v640 = vpop.f32.mrf.mxu0
    %v641 = vadd.f32 %v113, %v640
    %v642 = vpop.f32.mrf.mxu0
    %643 = vmatprep.mubr.f32.mxu0 0.0
    %644 = vmatmul.mubr.f32.gmra.mxu0 %v486
    %v645 = vpop.f32.mrf.mxu0
    %v646 = vadd.f32 %v113, %v645
    %v647 = vpop.f32.mrf.mxu0
    %648 = vmatprep.mubr.f32.mxu0 0.0
    %649 = vmatmul.mubr.f32.gmra.mxu0 %v487
    %v650 = vpop.f32.mrf.mxu0
    %v651 = vadd.f32 %v113, %v650
    %v652 = vpop.f32.mrf.mxu0
    %653 = vmatprep.mubr.f32.mxu0 0.0
    %654 = vmatmul.mubr.f32.gmra.mxu0 %v488
    %v655 = vpop.f32.mrf.mxu0
    %v656 = vadd.f32 %v113, %v655
    %v657 = vpop.f32.mrf.mxu0
    %658 = vmatprep.mubr.f32.mxu0 0.0
    %659 = vmatmul.mubr.f32.gmra.mxu0 %v489
    %v660 = vpop.f32.mrf.mxu0
    %v661 = vadd.f32 %v113, %v660
    %v662 = vpop.f32.mrf.mxu0
    %663 = vmatprep.mubr.f32.mxu0 0.0
    %664 = vmatmul.mubr.f32.gmra.mxu0 %v490
    %v665 = vpop.f32.mrf.mxu0
    %v666 = vadd.f32 %v113, %v665
    %v667 = vpop.f32.mrf.mxu0
    %668 = vmatprep.mubr.f32.mxu0 0.0
    %669 = vmatmul.mubr.f32.gmra.mxu0 %v491
    %v670 = vpop.f32.mrf.mxu0
    %v671 = vadd.f32 %v113, %v670
    %v672 = vpop.f32.mrf.mxu0
    %673 = vmatprep.mubr.f32.mxu0 0.0
    %674 = vmatmul.mubr.f32.gmra.mxu0 %v492
    %v675 = vpop.f32.mrf.mxu0
    %v676 = vadd.f32 %v113, %v675
    %v677 = vpop.f32.mrf.mxu0
    %678 = vmatprep.mubr.f32.mxu0 0.0
    %679 = vmatmul.mubr.f32.gmra.mxu0 %v493
    %v680 = vpop.f32.mrf.mxu0
    %v681 = vadd.f32 %v113, %v680
    %v682 = vpop.f32.mrf.mxu0
    %683 = vmatprep.mubr.f32.mxu0 0.0
    %684 = vmatmul.mubr.f32.gmra.mxu0 %v494
    %v685 = vpop.f32.mrf.mxu0
    %v686 = vadd.f32 %v113, %v685
    %v687 = vpop.f32.mrf.mxu0
    %688 = vmatprep.mubr.f32.mxu0 0.0
    %689 = vmatmul.mubr.f32.gmra.mxu0 %v495
    %v690 = vpop.f32.mrf.mxu0
    %v691 = vadd.f32 %v113, %v690
    %v692 = vpop.f32.mrf.mxu0
    %693 = vmatprep.mubr.f32.mxu0 0.0
    %694 = vmatmul.mubr.f32.gmra.mxu0 %v496
    %v695 = vpop.f32.mrf.mxu0
    %v696 = vadd.f32 %v113, %v695
    %v697 = vpop.f32.mrf.mxu0
    %698 = vmatprep.mubr.f32.mxu0 0.0
    %699 = vmatmul.mubr.f32.gmra.mxu0 %v497
    %v700 = vpop.f32.mrf.mxu0
    %v701 = vadd.f32 %v113, %v700
    %v702 = vpop.f32.mrf.mxu0
    %703 = vmatprep.mubr.f32.mxu0 0.0
    %704 = vmatmul.mubr.f32.gmra.mxu0 %v498
    %v705 = vpop.f32.mrf.mxu0
    %v706 = vadd.f32 %v113, %v705
    %v707 = vpop.f32.mrf.mxu0
    %708 = vmatprep.mubr.f32.mxu0 0.0
    %709 = vmatmul.mubr.f32.gmra.mxu0 %v499
    %v710 = vpop.f32.mrf.mxu0
    %v711 = vadd.f32 %v113, %v710
    %v712 = vpop.f32.mrf.mxu0
    %713 = vmatprep.mubr.f32.mxu0 0.0
    %714 = vmatmul.mubr.f32.gmra.mxu0 %v500
    %v715 = vpop.f32.mrf.mxu0
    %v716 = vadd.f32 %v113, %v715
    %v717 = vpop.f32.mrf.mxu0
    %718 = vmatprep.mubr.f32.mxu0 0.0
    %719 = vmatmul.mubr.f32.gmra.mxu0 %v501
    %v720 = vpop.f32.mrf.mxu0
    %v721 = vadd.f32 %v113, %v720
    %v722 = vpop.f32.mrf.mxu0
    %723 = vmatprep.mubr.f32.mxu0 0.0
    %724 = vmatmul.mubr.f32.gmra.mxu0 %v502
    %v725 = vpop.f32.mrf.mxu0
    %v726 = vadd.f32 %v113, %v725
    %v727 = vpop.f32.mrf.mxu0
    %728 = vmatprep.mubr.f32.mxu0 0.0
    %729 = vmatmul.mubr.f32.gmra.mxu0 %v503
    %v730 = vpop.f32.mrf.mxu0
    %v731 = vadd.f32 %v113, %v730
    %v732 = vpop.f32.mrf.mxu0
    %733 = vmatprep.mubr.f32.mxu0 0.0
    %734 = vmatmul.mubr.f32.gmra.mxu0 %v504
    %v735 = vpop.f32.mrf.mxu0
    %v736 = vadd.f32 %v113, %v735
    %v737 = vpop.f32.mrf.mxu0
    %738 = vmatprep.mubr.f32.mxu0 0.0
    %739 = vmatmul.mubr.f32.gmra.mxu0 %v505
    %v740 = vpop.f32.mrf.mxu0
    %v741 = vadd.f32 %v113, %v740
    %v742 = vpop.f32.mrf.mxu0
    %743 = vmatprep.mubr.f32.mxu0 0.0
    %744 = vmatmul.mubr.f32.gmra.mxu0 %v506
    %v745 = vpop.f32.mrf.mxu0
    %v746 = vadd.f32 %v113, %v745
    %v747 = vpop.f32.mrf.mxu0
    %748 = vmatprep.mubr.f32.mxu0 0.0
    %749 = vmatmul.mubr.f32.gmra.mxu0 %v507
    %v750 = vpop.f32.mrf.mxu0
    %v751 = vadd.f32 %v113, %v750
    %v752 = vpop.f32.mrf.mxu0
    %753 = vmatprep.mubr.f32.mxu0 0.0
    %754 = vmatmul.mubr.f32.gmra.mxu0 %v508
    %v755 = vpop.f32.mrf.mxu0
    %v756 = vadd.f32 %v113, %v755
    %v757 = vpop.f32.mrf.mxu0
    %758 = vmatprep.mubr.f32.mxu0 0.0
    %759 = vmatmul.mubr.f32.gmra.mxu0 %v509
    %v760 = vpop.f32.mrf.mxu0
    %v761 = vadd.f32 %v113, %v760
    %v762 = vpop.f32.mrf.mxu0
    %763 = vmatprep.mubr.f32.mxu0 0.0
    %764 = vmatmul.mubr.f32.gmra.mxu0 %v510
    %v765 = vpop.f32.mrf.mxu0
    %v766 = vadd.f32 %v113, %v765
    %v767 = vpop.f32.mrf.mxu0
    %768 = vmatprep.mubr.f32.mxu0 0.0
    %769 = vmatmul.mubr.f32.gmra.mxu0 %v511
    %v770 = vpop.f32.mrf.mxu0
    %v771 = vadd.f32 %v113, %v770
    %v772 = vpop.f32.mrf.mxu0
    %773 = vmatprep.mubr.f32.mxu0 0.0
    %774 = vmatmul.mubr.f32.gmra.mxu0 %v512
    %v775 = vpop.f32.mrf.mxu0
    %v776 = vadd.f32 %v113, %v775
    %v777 = vpop.f32.mrf.mxu0
    %778 = vmatprep.mubr.f32.mxu0 0.0
    %779 = vmatmul.mubr.f32.gmra.mxu0 %v513
    %v780 = vpop.f32.mrf.mxu0
    %v781 = vadd.f32 %v113, %v780
    %v782 = vpop.f32.mrf.mxu0
    %783 = vmatprep.mubr.f32.mxu0 0.0
    %784 = vmatmul.mubr.f32.gmra.mxu0 %v514
    %v785 = vpop.f32.mrf.mxu0
    %v786 = vadd.f32 %v113, %v785
    %v787 = vpop.f32.mrf.mxu0
    %788 = vmatprep.mubr.f32.mxu0 0.0
    %789 = vmatmul.mubr.f32.gmra.mxu0 %v515
    %v790 = vpop.f32.mrf.mxu0
    %v791 = vadd.f32 %v113, %v790
    %v792 = vpop.f32.mrf.mxu0
    %793 = vmatprep.mubr.f32.mxu0 0.0
    %794 = vmatmul.mubr.f32.gmra.mxu0 %v516
    %v795 = vpop.f32.mrf.mxu0
    %v796 = vadd.f32 %v113, %v795
    %v797 = vpop.f32.mrf.mxu0
    %798 = vmatprep.mubr.f32.mxu0 0.0
    %799 = vmatmul.mubr.f32.gmra.mxu0 %v517
    %v800 = vpop.f32.mrf.mxu0
    %v801 = vadd.f32 %v113, %v800
    %v802 = vpop.f32.mrf.mxu0
    %803 = vmatprep.mubr.f32.mxu0 0.0
    %804 = vmatmul.mubr.f32.gmra.mxu0 %v518
    %v805 = vpop.f32.mrf.mxu0
    %v806 = vadd.f32 %v113, %v805
    %v807 = vpop.f32.mrf.mxu0
    %808 = vmatprep.mubr.f32.mxu0 0.0
    %809 = vmatmul.mubr.f32.gmra.mxu0 %v519
    %v810 = vpop.f32.mrf.mxu0
    %v811 = vadd.f32 %v113, %v810
    %v812 = vpop.f32.mrf.mxu0
    %813 = vmatprep.mubr.f32.mxu0 0.0
    %814 = vmatmul.mubr.f32.gmra.mxu0 %v520
    %v815 = vpop.f32.mrf.mxu0
    %v816 = vadd.f32 %v113, %v815
    %v817 = vpop.f32.mrf.mxu0
    %818 = vmatprep.mubr.f32.mxu0 0.0
    %819 = vmatmul.mubr.f32.gmra.mxu0 %v521
    %v820 = vpop.f32.mrf.mxu0
    %v821 = vadd.f32 %v113, %v820
    %v822 = vpop.f32.mrf.mxu0
    %823 = vmatprep.mubr.f32.mxu0 0.0
    %824 = vmatmul.mubr.f32.gmra.mxu0 %v522
    %v825 = vpop.f32.mrf.mxu0
    %v826 = vadd.f32 %v113, %v825
    %v827 = vpop.f32.mrf.mxu0
    %828 = vmatprep.mubr.f32.mxu0 0.0
    %829 = vmatmul.mubr.f32.gmra.mxu0 %v523
    %v830 = vpop.f32.mrf.mxu0
    %v831 = vadd.f32 %v113, %v830
    %v832 = vpop.f32.mrf.mxu0
    %833 = vdwg.mxu0
    %v834 = vmax.f32 %v591, 0.0
    %v835 = vmax.f32 %v596, 0.0
    %v836 = vmax.f32 %v601, 0.0
    %v837 = vmax.f32 %v606, 0.0
    %v838 = vmax.f32 %v611, 0.0
    %v839 = vmax.f32 %v616, 0.0
    %v840 = vmax.f32 %v621, 0.0
    %v841 = vmax.f32 %v626, 0.0
    %v842 = vmax.f32 %v631, 0.0
    %v843 = vmax.f32 %v636, 0.0
    %v844 = vmax.f32 %v641, 0.0
    %v845 = vmax.f32 %v646, 0.0
    %v846 = vmax.f32 %v651, 0.0
    %v847 = vmax.f32 %v656, 0.0
    %v848 = vmax.f32 %v661, 0.0
    %v849 = vmax.f32 %v666, 0.0
    %v850 = vmax.f32 %v671, 0.0
    %v851 = vmax.f32 %v676, 0.0
    %v852 = vmax.f32 %v681, 0.0
    %v853 = vmax.f32 %v686, 0.0
    %v854 = vmax.f32 %v691, 0.0
    %v855 = vmax.f32 %v696, 0.0
    %v856 = vmax.f32 %v701, 0.0
    %v857 = vmax.f32 %v706, 0.0
    %v858 = vmax.f32 %v711, 0.0
    %v859 = vmax.f32 %v716, 0.0
    %v860 = vmax.f32 %v721, 0.0
    %v861 = vmax.f32 %v726, 0.0
    %v862 = vmax.f32 %v731, 0.0
    %v863 = vmax.f32 %v736, 0.0
    %v864 = vmax.f32 %v741, 0.0
    %v865 = vmax.f32 %v746, 0.0
    %v866 = vmax.f32 %v751, 0.0
    %v867 = vmax.f32 %v756, 0.0
    %v868 = vmax.f32 %v761, 0.0
    %v869 = vmax.f32 %v766, 0.0
    %v870 = vmax.f32 %v771, 0.0
    %v871 = vmax.f32 %v776, 0.0
    %v872 = vmax.f32 %v781, 0.0
    %v873 = vmax.f32 %v786, 0.0
    %v874 = vmax.f32 %v791, 0.0
    %v875 = vmax.f32 %v796, 0.0
    %v876 = vmax.f32 %v801, 0.0
    %v877 = vmax.f32 %v806, 0.0
    %v878 = vmax.f32 %v811, 0.0
    %v879 = vmax.f32 %v816, 0.0
    %v880 = vmax.f32 %v821, 0.0
    %v881 = vmax.f32 %v826, 0.0
    %v882 = vmax.f32 %v831, 0.0
    %v883 = vmax.f32 %v425, %v834
    %v884 = vmax.f32 %v426, %v835
    %v885 = vmax.f32 %v427, %v836
    %v886 = vmax.f32 %v428, %v837
    %v887 = vmax.f32 %v429, %v838
    %v888 = vmax.f32 %v430, %v839
    %v889 = vmax.f32 %v431, %v840
    %v890 = vmax.f32 %v432, %v841
    %v891 = vmax.f32 %v433, %v842
    %v892 = vmax.f32 %v434, %v843
    %v893 = vmax.f32 %v435, %v844
    %v894 = vmax.f32 %v436, %v845
    %v895 = vmax.f32 %v437, %v846
    %v896 = vmax.f32 %v438, %v847
    %v897 = vmax.f32 %v439, %v848
    %v898 = vmax.f32 %v440, %v849
    %v899 = vmax.f32 %v441, %v850
    %v900 = vmax.f32 %v442, %v851
    %v901 = vmax.f32 %v443, %v852
    %v902 = vmax.f32 %v444, %v853
    %v903 = vmax.f32 %v445, %v854
    %v904 = vmax.f32 %v446, %v855
    %v905 = vmax.f32 %v447, %v856
    %v906 = vmax.f32 %v448, %v857
    %v907 = vmax.f32 %v449, %v858
    %v908 = vmax.f32 %v450, %v859
    %v909 = vmax.f32 %v451, %v860
    %v910 = vmax.f32 %v452, %v861
    %v911 = vmax.f32 %v453, %v862
    %v912 = vmax.f32 %v454, %v863
    %v913 = vmax.f32 %v455, %v864
    %v914 = vmax.f32 %v456, %v865
    %v915 = vmax.f32 %v457, %v866
    %v916 = vmax.f32 %v458, %v867
    %v917 = vmax.f32 %v459, %v868
    %v918 = vmax.f32 %v460, %v869
    %v919 = vmax.f32 %v461, %v870
    %v920 = vmax.f32 %v462, %v871
    %v921 = vmax.f32 %v463, %v872
    %v922 = vmax.f32 %v464, %v873
    %v923 = vmax.f32 %v465, %v874
    %v924 = vmax.f32 %v466, %v875
    %v925 = vmax.f32 %v467, %v876
    %v926 = vmax.f32 %v468, %v877
    %v927 = vmax.f32 %v469, %v878
    %v928 = vmax.f32 %v470, %v879
    %v929 = vmax.f32 %v471, %v880
    %v930 = vmax.f32 %v472, %v881
    %v931 = vmax.f32 %v473, %v882
    %s932 = scalar_lea.vmem [#allocation2], 784
    %v933 = vld [vmem:[%s932] sm:$0xff]
    %v934 = vld [vmem:[%s932 + $0x8] sm:$0xff]
    %v935 = vld [vmem:[%s932 + $0x10] sm:$0xff]
    %v936 = vld [vmem:[%s932 + $0x18] sm:$0xff]
    %v937 = vld [vmem:[%s932 + $0x20] sm:$0xff]
    %v938 = vld [vmem:[%s932 + $0x28] sm:$0xff]
    %v939 = vld [vmem:[%s932 + $0x30] sm:$0xff]
    %v940 = vld [vmem:[%s932 + $0x38] sm:$0xff]
    %v941 = vld [vmem:[%s932 + $0x40] sm:$0xff]
    %v942 = vld [vmem:[%s932 + $0x48] sm:$0xff]
    %v943 = vld [vmem:[%s932 + $0x50] sm:$0xff]
    %v944 = vld [vmem:[%s932 + $0x58] sm:$0xff]
    %v945 = vld [vmem:[%s932 + $0x60] sm:$0xff]
    %v946 = vld [vmem:[%s932 + $0x68] sm:$0xff]
    %v947 = vld [vmem:[%s932 + $0x70] sm:$0xff]
    %v948 = vld [vmem:[%s932 + $0x78] sm:$0xff]
    %v949 = vld [vmem:[%s932 + $0x80] sm:$0xff]
    %v950 = vld [vmem:[%s932 + $0x88] sm:$0xff]
    %v951 = vld [vmem:[%s932 + $0x90] sm:$0xff]
    %v952 = vld [vmem:[%s932 + $0x98] sm:$0xff]
    %v953 = vld [vmem:[%s932 + $0xa0] sm:$0xff]
    %v954 = vld [vmem:[%s932 + $0xa8] sm:$0xff]
    %v955 = vld [vmem:[%s932 + $0xb0] sm:$0xff]
    %v956 = vld [vmem:[%s932 + $0xb8] sm:$0xff]
    %v957 = vld [vmem:[%s932 + $0xc0] sm:$0xff]
    %v958 = vld [vmem:[%s932 + $0xc8] sm:$0xff]
    %v959 = vld [vmem:[%s932 + $0xd0] sm:$0xff]
    %v960 = vld [vmem:[%s932 + $0xd8] sm:$0xff]
    %v961 = vld [vmem:[%s932 + $0xe0] sm:$0xff]
    %v962 = vld [vmem:[%s932 + $0xe8] sm:$0xff]
    %v963 = vld [vmem:[%s932 + $0xf0] sm:$0xff]
    %v964 = vld [vmem:[%s932 + $0xf8] sm:$0xff]
    %v965 = vld [vmem:[%s932 + $0x100] sm:$0xff]
    %v966 = vld [vmem:[%s932 + $0x108] sm:$0xff]
    %v967 = vld [vmem:[%s932 + $0x110] sm:$0xff]
    %v968 = vld [vmem:[%s932 + $0x118] sm:$0xff]
    %v969 = vld [vmem:[%s932 + $0x120] sm:$0xff]
    %v970 = vld [vmem:[%s932 + $0x128] sm:$0xff]
    %v971 = vld [vmem:[%s932 + $0x130] sm:$0xff]
    %v972 = vld [vmem:[%s932 + $0x138] sm:$0xff]
    %v973 = vld [vmem:[%s932 + $0x140] sm:$0xff]
    %v974 = vld [vmem:[%s932 + $0x148] sm:$0xff]
    %v975 = vld [vmem:[%s932 + $0x150] sm:$0xff]
    %v976 = vld [vmem:[%s932 + $0x158] sm:$0xff]
    %v977 = vld [vmem:[%s932 + $0x160] sm:$0xff]
    %v978 = vld [vmem:[%s932 + $0x168] sm:$0xff]
    %v979 = vld [vmem:[%s932 + $0x170] sm:$0xff]
    %v980 = vld [vmem:[%s932 + $0x178] sm:$0xff]
    %v981 = vld [vmem:[%s932 + $0x180] sm:$0xff]
    %982 = vmatprep.subr.mxu0 0.0
    %983 = vmatpush1.msra.mxu0 %v58
    %984 = vmatprep.subr.mxu0 0.0
    %985 = vmatpush1.msra.mxu0 %v57
    %986 = vmatprep.subr.mxu0 0.0
    %987 = vmatpush1.msra.mxu0 %v56
    %988 = vmatprep.subr.mxu0 0.0
    %989 = vmatpush1.msra.mxu0 %v55
    %990 = vmatprep.subr.mxu0 0.0
    %991 = vmatpush1.msra.mxu0 %v54
    %992 = vmatprep.subr.mxu0 0.0
    %993 = vmatpush1.msra.mxu0 %v53
    %994 = vmatprep.subr.mxu0 0.0
    %995 = vmatpush1.msra.mxu0 %v52
    %996 = vmatprep.subr.mxu0 0.0
    %997 = vmatpush1.msra.mxu0 %v51
    %998 = vmatprep.subr.mxu0 0.0
    %999 = vmatpush1.msra.mxu0 %v50
    %1000 = vmatprep.subr.mxu0 0.0
    %1001 = vmatpush1.msra.mxu0 %v49
    %1002 = vmatprep.subr.mxu0 0.0
    %1003 = vmatpush1.msra.mxu0 %v48
    %1004 = vmatprep.subr.mxu0 0.0
    %1005 = vmatpush1.msra.mxu0 %v47
    %1006 = vmatprep.subr.mxu0 0.0
    %1007 = vmatpush1.msra.mxu0 %v46
    %1008 = vmatprep.subr.mxu0 0.0
    %1009 = vmatpush1.msra.mxu0 %v45
    %1010 = vmatprep.subr.mxu0 0.0
    %1011 = vmatpush1.msra.mxu0 %v44
    %1012 = vmatprep.subr.mxu0 0.0
    %1013 = vmatpush1.msra.mxu0 %v43
    %1014 = vmatprep.subr.mxu0 0.0
    %1015 = vmatpush2.msra.mxu0 0.0
    %1016 = vmatprep.subr.mxu0 0.0
    %1017 = vmatpush2.msra.mxu0 0.0
    %1018 = vmatprep.subr.mxu0 0.0
    %1019 = vmatpush2.msra.mxu0 0.0
    %1020 = vmatprep.subr.mxu0 0.0
    %1021 = vmatpush2.msra.mxu0 0.0
    %1022 = vmatprep.subr.mxu0 0.0
    %1023 = vmatpush2.msra.mxu0 0.0
    %1024 = vmatprep.subr.mxu0 0.0
    %1025 = vmatpush2.msra.mxu0 0.0
    %1026 = vmatprep.subr.mxu0 0.0
    %1027 = vmatpush2.msra.mxu0 0.0
    %1028 = vmatprep.subr.mxu0 0.0
    %1029 = vmatpush2.msra.mxu0 0.0
    %1030 = vmatprep.subr.mxu0 0.0
    %1031 = vmatpush2.msra.mxu0 0.0
    %1032 = vmatprep.subr.mxu0 0.0
    %1033 = vmatpush2.msra.mxu0 0.0
    %1034 = vmatprep.subr.mxu0 0.0
    %1035 = vmatpush2.msra.mxu0 0.0
    %1036 = vmatprep.subr.mxu0 0.0
    %1037 = vmatpush2.msra.mxu0 0.0
    %1038 = vmatprep.subr.mxu0 0.0
    %1039 = vmatpush2.msra.mxu0 0.0
    %1040 = vmatprep.subr.mxu0 0.0
    %1041 = vmatpush2.msra.mxu0 0.0
    %1042 = vmatprep.subr.mxu0 0.0
    %1043 = vmatpush2.msra.mxu0 0.0
    %1044 = vmatprep.subr.mxu0 0.0
    %1045 = vmatpush2.msra.mxu0 0.0
    %1046 = vmatprep.mubr.f32.mxu0 0.0
    %1047 = vmatmul.mubr.f32.gmra.mxu0 %v933
    %v1048 = vpop.f32.mrf.mxu0
    %v1049 = vadd.f32 %v113, %v1048
    %v1050 = vpop.f32.mrf.mxu0
    %1051 = vmatprep.mubr.f32.mxu0 0.0
    %1052 = vmatmul.mubr.f32.gmra.mxu0 %v934
    %v1053 = vpop.f32.mrf.mxu0
    %v1054 = vadd.f32 %v113, %v1053
    %v1055 = vpop.f32.mrf.mxu0
    %1056 = vmatprep.mubr.f32.mxu0 0.0
    %1057 = vmatmul.mubr.f32.gmra.mxu0 %v935
    %v1058 = vpop.f32.mrf.mxu0
    %v1059 = vadd.f32 %v113, %v1058
    %v1060 = vpop.f32.mrf.mxu0
    %1061 = vmatprep.mubr.f32.mxu0 0.0
    %1062 = vmatmul.mubr.f32.gmra.mxu0 %v936
    %v1063 = vpop.f32.mrf.mxu0
    %v1064 = vadd.f32 %v113, %v1063
    %v1065 = vpop.f32.mrf.mxu0
    %1066 = vmatprep.mubr.f32.mxu0 0.0
    %1067 = vmatmul.mubr.f32.gmra.mxu0 %v937
    %v1068 = vpop.f32.mrf.mxu0
    %v1069 = vadd.f32 %v113, %v1068
    %v1070 = vpop.f32.mrf.mxu0
    %1071 = vmatprep.mubr.f32.mxu0 0.0
    %1072 = vmatmul.mubr.f32.gmra.mxu0 %v938
    %v1073 = vpop.f32.mrf.mxu0
    %v1074 = vadd.f32 %v113, %v1073
    %v1075 = vpop.f32.mrf.mxu0
    %1076 = vmatprep.mubr.f32.mxu0 0.0
    %1077 = vmatmul.mubr.f32.gmra.mxu0 %v939
    %v1078 = vpop.f32.mrf.mxu0
    %v1079 = vadd.f32 %v113, %v1078
    %v1080 = vpop.f32.mrf.mxu0
    %1081 = vmatprep.mubr.f32.mxu0 0.0
    %1082 = vmatmul.mubr.f32.gmra.mxu0 %v940
    %v1083 = vpop.f32.mrf.mxu0
    %v1084 = vadd.f32 %v113, %v1083
    %v1085 = vpop.f32.mrf.mxu0
    %1086 = vmatprep.mubr.f32.mxu0 0.0
    %1087 = vmatmul.mubr.f32.gmra.mxu0 %v941
    %v1088 = vpop.f32.mrf.mxu0
    %v1089 = vadd.f32 %v113, %v1088
    %v1090 = vpop.f32.mrf.mxu0
    %1091 = vmatprep.mubr.f32.mxu0 0.0
    %1092 = vmatmul.mubr.f32.gmra.mxu0 %v942
    %v1093 = vpop.f32.mrf.mxu0
    %v1094 = vadd.f32 %v113, %v1093
    %v1095 = vpop.f32.mrf.mxu0
    %1096 = vmatprep.mubr.f32.mxu0 0.0
    %1097 = vmatmul.mubr.f32.gmra.mxu0 %v943
    %v1098 = vpop.f32.mrf.mxu0
    %v1099 = vadd.f32 %v113, %v1098
    %v1100 = vpop.f32.mrf.mxu0
    %1101 = vmatprep.mubr.f32.mxu0 0.0
    %1102 = vmatmul.mubr.f32.gmra.mxu0 %v944
    %v1103 = vpop.f32.mrf.mxu0
    %v1104 = vadd.f32 %v113, %v1103
    %v1105 = vpop.f32.mrf.mxu0
    %1106 = vmatprep.mubr.f32.mxu0 0.0
    %1107 = vmatmul.mubr.f32.gmra.mxu0 %v945
    %v1108 = vpop.f32.mrf.mxu0
    %v1109 = vadd.f32 %v113, %v1108
    %v1110 = vpop.f32.mrf.mxu0
    %1111 = vmatprep.mubr.f32.mxu0 0.0
    %1112 = vmatmul.mubr.f32.gmra.mxu0 %v946
    %v1113 = vpop.f32.mrf.mxu0
    %v1114 = vadd.f32 %v113, %v1113
    %v1115 = vpop.f32.mrf.mxu0
    %1116 = vmatprep.mubr.f32.mxu0 0.0
    %1117 = vmatmul.mubr.f32.gmra.mxu0 %v947
    %v1118 = vpop.f32.mrf.mxu0
    %v1119 = vadd.f32 %v113, %v1118
    %v1120 = vpop.f32.mrf.mxu0
    %1121 = vmatprep.mubr.f32.mxu0 0.0
    %1122 = vmatmul.mubr.f32.gmra.mxu0 %v948
    %v1123 = vpop.f32.mrf.mxu0
    %v1124 = vadd.f32 %v113, %v1123
    %v1125 = vpop.f32.mrf.mxu0
    %1126 = vmatprep.mubr.f32.mxu0 0.0
    %1127 = vmatmul.mubr.f32.gmra.mxu0 %v949
    %v1128 = vpop.f32.mrf.mxu0
    %v1129 = vadd.f32 %v113, %v1128
    %v1130 = vpop.f32.mrf.mxu0
    %1131 = vmatprep.mubr.f32.mxu0 0.0
    %1132 = vmatmul.mubr.f32.gmra.mxu0 %v950
    %v1133 = vpop.f32.mrf.mxu0
    %v1134 = vadd.f32 %v113, %v1133
    %v1135 = vpop.f32.mrf.mxu0
    %1136 = vmatprep.mubr.f32.mxu0 0.0
    %1137 = vmatmul.mubr.f32.gmra.mxu0 %v951
    %v1138 = vpop.f32.mrf.mxu0
    %v1139 = vadd.f32 %v113, %v1138
    %v1140 = vpop.f32.mrf.mxu0
    %1141 = vmatprep.mubr.f32.mxu0 0.0
    %1142 = vmatmul.mubr.f32.gmra.mxu0 %v952
    %v1143 = vpop.f32.mrf.mxu0
    %v1144 = vadd.f32 %v113, %v1143
    %v1145 = vpop.f32.mrf.mxu0
    %1146 = vmatprep.mubr.f32.mxu0 0.0
    %1147 = vmatmul.mubr.f32.gmra.mxu0 %v953
    %v1148 = vpop.f32.mrf.mxu0
    %v1149 = vadd.f32 %v113, %v1148
    %v1150 = vpop.f32.mrf.mxu0
    %1151 = vmatprep.mubr.f32.mxu0 0.0
    %1152 = vmatmul.mubr.f32.gmra.mxu0 %v954
    %v1153 = vpop.f32.mrf.mxu0
    %v1154 = vadd.f32 %v113, %v1153
    %v1155 = vpop.f32.mrf.mxu0
    %1156 = vmatprep.mubr.f32.mxu0 0.0
    %1157 = vmatmul.mubr.f32.gmra.mxu0 %v955
    %v1158 = vpop.f32.mrf.mxu0
    %v1159 = vadd.f32 %v113, %v1158
    %v1160 = vpop.f32.mrf.mxu0
    %1161 = vmatprep.mubr.f32.mxu0 0.0
    %1162 = vmatmul.mubr.f32.gmra.mxu0 %v956
    %v1163 = vpop.f32.mrf.mxu0
    %v1164 = vadd.f32 %v113, %v1163
    %v1165 = vpop.f32.mrf.mxu0
    %1166 = vmatprep.mubr.f32.mxu0 0.0
    %1167 = vmatmul.mubr.f32.gmra.mxu0 %v957
    %v1168 = vpop.f32.mrf.mxu0
    %v1169 = vadd.f32 %v113, %v1168
    %v1170 = vpop.f32.mrf.mxu0
    %1171 = vmatprep.mubr.f32.mxu0 0.0
    %1172 = vmatmul.mubr.f32.gmra.mxu0 %v958
    %v1173 = vpop.f32.mrf.mxu0
    %v1174 = vadd.f32 %v113, %v1173
    %v1175 = vpop.f32.mrf.mxu0
    %1176 = vmatprep.mubr.f32.mxu0 0.0
    %1177 = vmatmul.mubr.f32.gmra.mxu0 %v959
    %v1178 = vpop.f32.mrf.mxu0
    %v1179 = vadd.f32 %v113, %v1178
    %v1180 = vpop.f32.mrf.mxu0
    %1181 = vmatprep.mubr.f32.mxu0 0.0
    %1182 = vmatmul.mubr.f32.gmra.mxu0 %v960
    %v1183 = vpop.f32.mrf.mxu0
    %v1184 = vadd.f32 %v113, %v1183
    %v1185 = vpop.f32.mrf.mxu0
    %1186 = vmatprep.mubr.f32.mxu0 0.0
    %1187 = vmatmul.mubr.f32.gmra.mxu0 %v961
    %v1188 = vpop.f32.mrf.mxu0
    %v1189 = vadd.f32 %v113, %v1188
    %v1190 = vpop.f32.mrf.mxu0
    %1191 = vmatprep.mubr.f32.mxu0 0.0
    %1192 = vmatmul.mubr.f32.gmra.mxu0 %v962
    %v1193 = vpop.f32.mrf.mxu0
    %v1194 = vadd.f32 %v113, %v1193
    %v1195 = vpop.f32.mrf.mxu0
    %1196 = vmatprep.mubr.f32.mxu0 0.0
    %1197 = vmatmul.mubr.f32.gmra.mxu0 %v963
    %v1198 = vpop.f32.mrf.mxu0
    %v1199 = vadd.f32 %v113, %v1198
    %v1200 = vpop.f32.mrf.mxu0
    %1201 = vmatprep.mubr.f32.mxu0 0.0
    %1202 = vmatmul.mubr.f32.gmra.mxu0 %v964
    %v1203 = vpop.f32.mrf.mxu0
    %v1204 = vadd.f32 %v113, %v1203
    %v1205 = vpop.f32.mrf.mxu0
    %1206 = vmatprep.mubr.f32.mxu0 0.0
    %1207 = vmatmul.mubr.f32.gmra.mxu0 %v965
    %v1208 = vpop.f32.mrf.mxu0
    %v1209 = vadd.f32 %v113, %v1208
    %v1210 = vpop.f32.mrf.mxu0
    %1211 = vmatprep.mubr.f32.mxu0 0.0
    %1212 = vmatmul.mubr.f32.gmra.mxu0 %v966
    %v1213 = vpop.f32.mrf.mxu0
    %v1214 = vadd.f32 %v113, %v1213
    %v1215 = vpop.f32.mrf.mxu0
    %1216 = vmatprep.mubr.f32.mxu0 0.0
    %1217 = vmatmul.mubr.f32.gmra.mxu0 %v967
    %v1218 = vpop.f32.mrf.mxu0
    %v1219 = vadd.f32 %v113, %v1218
    %v1220 = vpop.f32.mrf.mxu0
    %1221 = vmatprep.mubr.f32.mxu0 0.0
    %1222 = vmatmul.mubr.f32.gmra.mxu0 %v968
    %v1223 = vpop.f32.mrf.mxu0
    %v1224 = vadd.f32 %v113, %v1223
    %v1225 = vpop.f32.mrf.mxu0
    %1226 = vmatprep.mubr.f32.mxu0 0.0
    %1227 = vmatmul.mubr.f32.gmra.mxu0 %v969
    %v1228 = vpop.f32.mrf.mxu0
    %v1229 = vadd.f32 %v113, %v1228
    %v1230 = vpop.f32.mrf.mxu0
    %1231 = vmatprep.mubr.f32.mxu0 0.0
    %1232 = vmatmul.mubr.f32.gmra.mxu0 %v970
    %v1233 = vpop.f32.mrf.mxu0
    %v1234 = vadd.f32 %v113, %v1233
    %v1235 = vpop.f32.mrf.mxu0
    %1236 = vmatprep.mubr.f32.mxu0 0.0
    %1237 = vmatmul.mubr.f32.gmra.mxu0 %v971
    %v1238 = vpop.f32.mrf.mxu0
    %v1239 = vadd.f32 %v113, %v1238
    %v1240 = vpop.f32.mrf.mxu0
    %1241 = vmatprep.mubr.f32.mxu0 0.0
    %1242 = vmatmul.mubr.f32.gmra.mxu0 %v972
    %v1243 = vpop.f32.mrf.mxu0
    %v1244 = vadd.f32 %v113, %v1243
    %v1245 = vpop.f32.mrf.mxu0
    %1246 = vmatprep.mubr.f32.mxu0 0.0
    %1247 = vmatmul.mubr.f32.gmra.mxu0 %v973
    %v1248 = vpop.f32.mrf.mxu0
    %v1249 = vadd.f32 %v113, %v1248
    %v1250 = vpop.f32.mrf.mxu0
    %1251 = vmatprep.mubr.f32.mxu0 0.0
    %1252 = vmatmul.mubr.f32.gmra.mxu0 %v974
    %v1253 = vpop.f32.mrf.mxu0
    %v1254 = vadd.f32 %v113, %v1253
    %v1255 = vpop.f32.mrf.mxu0
    %1256 = vmatprep.mubr.f32.mxu0 0.0
    %1257 = vmatmul.mubr.f32.gmra.mxu0 %v975
    %v1258 = vpop.f32.mrf.mxu0
    %v1259 = vadd.f32 %v113, %v1258
    %v1260 = vpop.f32.mrf.mxu0
    %1261 = vmatprep.mubr.f32.mxu0 0.0
    %1262 = vmatmul.mubr.f32.gmra.mxu0 %v976
    %v1263 = vpop.f32.mrf.mxu0
    %v1264 = vadd.f32 %v113, %v1263
    %v1265 = vpop.f32.mrf.mxu0
    %1266 = vmatprep.mubr.f32.mxu0 0.0
    %1267 = vmatmul.mubr.f32.gmra.mxu0 %v977
    %v1268 = vpop.f32.mrf.mxu0
    %v1269 = vadd.f32 %v113, %v1268
    %v1270 = vpop.f32.mrf.mxu0
    %1271 = vmatprep.mubr.f32.mxu0 0.0
    %1272 = vmatmul.mubr.f32.gmra.mxu0 %v978
    %v1273 = vpop.f32.mrf.mxu0
    %v1274 = vadd.f32 %v113, %v1273
    %v1275 = vpop.f32.mrf.mxu0
    %1276 = vmatprep.mubr.f32.mxu0 0.0
    %1277 = vmatmul.mubr.f32.gmra.mxu0 %v979
    %v1278 = vpop.f32.mrf.mxu0
    %v1279 = vadd.f32 %v113, %v1278
    %v1280 = vpop.f32.mrf.mxu0
    %1281 = vmatprep.mubr.f32.mxu0 0.0
    %1282 = vmatmul.mubr.f32.gmra.mxu0 %v980
    %v1283 = vpop.f32.mrf.mxu0
    %v1284 = vadd.f32 %v113, %v1283
    %v1285 = vpop.f32.mrf.mxu0
    %1286 = vmatprep.mubr.f32.mxu0 0.0
    %1287 = vmatmul.mubr.f32.gmra.mxu0 %v981
    %v1288 = vpop.f32.mrf.mxu0
    %v1289 = vadd.f32 %v113, %v1288
    %v1290 = vpop.f32.mrf.mxu0
    %1291 = vdwg.mxu0
    %v1292 = vmax.f32 %v1049, 0.0
    %v1293 = vmax.f32 %v1054, 0.0
    %v1294 = vmax.f32 %v1059, 0.0
    %v1295 = vmax.f32 %v1064, 0.0
    %v1296 = vmax.f32 %v1069, 0.0
    %v1297 = vmax.f32 %v1074, 0.0
    %v1298 = vmax.f32 %v1079, 0.0
    %v1299 = vmax.f32 %v1084, 0.0
    %v1300 = vmax.f32 %v1089, 0.0
    %v1301 = vmax.f32 %v1094, 0.0
    %v1302 = vmax.f32 %v1099, 0.0
    %v1303 = vmax.f32 %v1104, 0.0
    %v1304 = vmax.f32 %v1109, 0.0
    %v1305 = vmax.f32 %v1114, 0.0
    %v1306 = vmax.f32 %v1119, 0.0
    %v1307 = vmax.f32 %v1124, 0.0
    %v1308 = vmax.f32 %v1129, 0.0
    %v1309 = vmax.f32 %v1134, 0.0
    %v1310 = vmax.f32 %v1139, 0.0
    %v1311 = vmax.f32 %v1144, 0.0
    %v1312 = vmax.f32 %v1149, 0.0
    %v1313 = vmax.f32 %v1154, 0.0
    %v1314 = vmax.f32 %v1159, 0.0
    %v1315 = vmax.f32 %v1164, 0.0
    %v1316 = vmax.f32 %v1169, 0.0
    %v1317 = vmax.f32 %v1174, 0.0
    %v1318 = vmax.f32 %v1179, 0.0
    %v1319 = vmax.f32 %v1184, 0.0
    %v1320 = vmax.f32 %v1189, 0.0
    %v1321 = vmax.f32 %v1194, 0.0
    %v1322 = vmax.f32 %v1199, 0.0
    %v1323 = vmax.f32 %v1204, 0.0
    %v1324 = vmax.f32 %v1209, 0.0
    %v1325 = vmax.f32 %v1214, 0.0
    %v1326 = vmax.f32 %v1219, 0.0
    %v1327 = vmax.f32 %v1224, 0.0
    %v1328 = vmax.f32 %v1229, 0.0
    %v1329 = vmax.f32 %v1234, 0.0
    %v1330 = vmax.f32 %v1239, 0.0
    %v1331 = vmax.f32 %v1244, 0.0
    %v1332 = vmax.f32 %v1249, 0.0
    %v1333 = vmax.f32 %v1254, 0.0
    %v1334 = vmax.f32 %v1259, 0.0
    %v1335 = vmax.f32 %v1264, 0.0
    %v1336 = vmax.f32 %v1269, 0.0
    %v1337 = vmax.f32 %v1274, 0.0
    %v1338 = vmax.f32 %v1279, 0.0
    %v1339 = vmax.f32 %v1284, 0.0
    %v1340 = vmax.f32 %v1289, 0.0
    %v1341 = vmax.f32 %v883, %v1292
    %v1342 = vmax.f32 %v884, %v1293
    %v1343 = vmax.f32 %v885, %v1294
    %v1344 = vmax.f32 %v886, %v1295
    %v1345 = vmax.f32 %v887, %v1296
    %v1346 = vmax.f32 %v888, %v1297
    %v1347 = vmax.f32 %v889, %v1298
    %v1348 = vmax.f32 %v890, %v1299
    %v1349 = vmax.f32 %v891, %v1300
    %v1350 = vmax.f32 %v892, %v1301
    %v1351 = vmax.f32 %v893, %v1302
    %v1352 = vmax.f32 %v894, %v1303
    %v1353 = vmax.f32 %v895, %v1304
    %v1354 = vmax.f32 %v896, %v1305
    %v1355 = vmax.f32 %v897, %v1306
    %v1356 = vmax.f32 %v898, %v1307
    %v1357 = vmax.f32 %v899, %v1308
    %v1358 = vmax.f32 %v900, %v1309
    %v1359 = vmax.f32 %v901, %v1310
    %v1360 = vmax.f32 %v902, %v1311
    %v1361 = vmax.f32 %v903, %v1312
    %v1362 = vmax.f32 %v904, %v1313
    %v1363 = vmax.f32 %v905, %v1314
    %v1364 = vmax.f32 %v906, %v1315
    %v1365 = vmax.f32 %v907, %v1316
    %v1366 = vmax.f32 %v908, %v1317
    %v1367 = vmax.f32 %v909, %v1318
    %v1368 = vmax.f32 %v910, %v1319
    %v1369 = vmax.f32 %v911, %v1320
    %v1370 = vmax.f32 %v912, %v1321
    %v1371 = vmax.f32 %v913, %v1322
    %v1372 = vmax.f32 %v914, %v1323
    %v1373 = vmax.f32 %v915, %v1324
    %v1374 = vmax.f32 %v916, %v1325
    %v1375 = vmax.f32 %v917, %v1326
    %v1376 = vmax.f32 %v918, %v1327
    %v1377 = vmax.f32 %v919, %v1328
    %v1378 = vmax.f32 %v920, %v1329
    %v1379 = vmax.f32 %v921, %v1330
    %v1380 = vmax.f32 %v922, %v1331
    %v1381 = vmax.f32 %v923, %v1332
    %v1382 = vmax.f32 %v924, %v1333
    %v1383 = vmax.f32 %v925, %v1334
    %v1384 = vmax.f32 %v926, %v1335
    %v1385 = vmax.f32 %v927, %v1336
    %v1386 = vmax.f32 %v928, %v1337
    %v1387 = vmax.f32 %v929, %v1338
    %v1388 = vmax.f32 %v930, %v1339
    %v1389 = vmax.f32 %v931, %v1340
    %s1390 = scalar_lea.vmem [#allocation2], 1176
    %v1391 = vld [vmem:[%s1390] sm:$0xff]
    %v1392 = vld [vmem:[%s1390 + $0x8] sm:$0xff]
    %v1393 = vld [vmem:[%s1390 + $0x10] sm:$0xff]
    %v1394 = vld [vmem:[%s1390 + $0x18] sm:$0xff]
    %v1395 = vld [vmem:[%s1390 + $0x20] sm:$0xff]
    %v1396 = vld [vmem:[%s1390 + $0x28] sm:$0xff]
    %v1397 = vld [vmem:[%s1390 + $0x30] sm:$0xff]
    %v1398 = vld [vmem:[%s1390 + $0x38] sm:$0xff]
    %v1399 = vld [vmem:[%s1390 + $0x40] sm:$0xff]
    %v1400 = vld [vmem:[%s1390 + $0x48] sm:$0xff]
    %v1401 = vld [vmem:[%s1390 + $0x50] sm:$0xff]
    %v1402 = vld [vmem:[%s1390 + $0x58] sm:$0xff]
    %v1403 = vld [vmem:[%s1390 + $0x60] sm:$0xff]
    %v1404 = vld [vmem:[%s1390 + $0x68] sm:$0xff]
    %v1405 = vld [vmem:[%s1390 + $0x70] sm:$0xff]
    %v1406 = vld [vmem:[%s1390 + $0x78] sm:$0xff]
    %v1407 = vld [vmem:[%s1390 + $0x80] sm:$0xff]
    %v1408 = vld [vmem:[%s1390 + $0x88] sm:$0xff]
    %v1409 = vld [vmem:[%s1390 + $0x90] sm:$0xff]
    %v1410 = vld [vmem:[%s1390 + $0x98] sm:$0xff]
    %v1411 = vld [vmem:[%s1390 + $0xa0] sm:$0xff]
    %v1412 = vld [vmem:[%s1390 + $0xa8] sm:$0xff]
    %v1413 = vld [vmem:[%s1390 + $0xb0] sm:$0xff]
    %v1414 = vld [vmem:[%s1390 + $0xb8] sm:$0xff]
    %v1415 = vld [vmem:[%s1390 + $0xc0] sm:$0xff]
    %v1416 = vld [vmem:[%s1390 + $0xc8] sm:$0xff]
    %v1417 = vld [vmem:[%s1390 + $0xd0] sm:$0xff]
    %v1418 = vld [vmem:[%s1390 + $0xd8] sm:$0xff]
    %v1419 = vld [vmem:[%s1390 + $0xe0] sm:$0xff]
    %v1420 = vld [vmem:[%s1390 + $0xe8] sm:$0xff]
    %v1421 = vld [vmem:[%s1390 + $0xf0] sm:$0xff]
    %v1422 = vld [vmem:[%s1390 + $0xf8] sm:$0xff]
    %v1423 = vld [vmem:[%s1390 + $0x100] sm:$0xff]
    %v1424 = vld [vmem:[%s1390 + $0x108] sm:$0xff]
    %v1425 = vld [vmem:[%s1390 + $0x110] sm:$0xff]
    %v1426 = vld [vmem:[%s1390 + $0x118] sm:$0xff]
    %v1427 = vld [vmem:[%s1390 + $0x120] sm:$0xff]
    %v1428 = vld [vmem:[%s1390 + $0x128] sm:$0xff]
    %v1429 = vld [vmem:[%s1390 + $0x130] sm:$0xff]
    %v1430 = vld [vmem:[%s1390 + $0x138] sm:$0xff]
    %v1431 = vld [vmem:[%s1390 + $0x140] sm:$0xff]
    %v1432 = vld [vmem:[%s1390 + $0x148] sm:$0xff]
    %v1433 = vld [vmem:[%s1390 + $0x150] sm:$0xff]
    %v1434 = vld [vmem:[%s1390 + $0x158] sm:$0xff]
    %v1435 = vld [vmem:[%s1390 + $0x160] sm:$0xff]
    %v1436 = vld [vmem:[%s1390 + $0x168] sm:$0xff]
    %v1437 = vld [vmem:[%s1390 + $0x170] sm:$0xff]
    %v1438 = vld [vmem:[%s1390 + $0x178] sm:$0xff]
    %v1439 = vld [vmem:[%s1390 + $0x180] sm:$0xff]
    %1440 = vmatprep.subr.mxu0 0.0
    %1441 = vmatpush1.msra.mxu0 %v58
    %1442 = vmatprep.subr.mxu0 0.0
    %1443 = vmatpush1.msra.mxu0 %v57
    %1444 = vmatprep.subr.mxu0 0.0
    %1445 = vmatpush1.msra.mxu0 %v56
    %1446 = vmatprep.subr.mxu0 0.0
    %1447 = vmatpush1.msra.mxu0 %v55
    %1448 = vmatprep.subr.mxu0 0.0
    %1449 = vmatpush1.msra.mxu0 %v54
    %1450 = vmatprep.subr.mxu0 0.0
    %1451 = vmatpush1.msra.mxu0 %v53
    %1452 = vmatprep.subr.mxu0 0.0
    %1453 = vmatpush1.msra.mxu0 %v52
    %1454 = vmatprep.subr.mxu0 0.0
    %1455 = vmatpush1.msra.mxu0 %v51
    %1456 = vmatprep.subr.mxu0 0.0
    %1457 = vmatpush1.msra.mxu0 %v50
    %1458 = vmatprep.subr.mxu0 0.0
    %1459 = vmatpush1.msra.mxu0 %v49
    %1460 = vmatprep.subr.mxu0 0.0
    %1461 = vmatpush1.msra.mxu0 %v48
    %1462 = vmatprep.subr.mxu0 0.0
    %1463 = vmatpush1.msra.mxu0 %v47
    %1464 = vmatprep.subr.mxu0 0.0
    %1465 = vmatpush1.msra.mxu0 %v46
    %1466 = vmatprep.subr.mxu0 0.0
    %1467 = vmatpush1.msra.mxu0 %v45
    %1468 = vmatprep.subr.mxu0 0.0
    %1469 = vmatpush1.msra.mxu0 %v44
    %1470 = vmatprep.subr.mxu0 0.0
    %1471 = vmatpush1.msra.mxu0 %v43
    %1472 = vmatprep.subr.mxu0 0.0
    %1473 = vmatpush2.msra.mxu0 0.0
    %1474 = vmatprep.subr.mxu0 0.0
    %1475 = vmatpush2.msra.mxu0 0.0
    %1476 = vmatprep.subr.mxu0 0.0
    %1477 = vmatpush2.msra.mxu0 0.0
    %1478 = vmatprep.subr.mxu0 0.0
    %1479 = vmatpush2.msra.mxu0 0.0
    %1480 = vmatprep.subr.mxu0 0.0
    %1481 = vmatpush2.msra.mxu0 0.0
    %1482 = vmatprep.subr.mxu0 0.0
    %1483 = vmatpush2.msra.mxu0 0.0
    %1484 = vmatprep.subr.mxu0 0.0
    %1485 = vmatpush2.msra.mxu0 0.0
    %1486 = vmatprep.subr.mxu0 0.0
    %1487 = vmatpush2.msra.mxu0 0.0
    %1488 = vmatprep.subr.mxu0 0.0
    %1489 = vmatpush2.msra.mxu0 0.0
    %1490 = vmatprep.subr.mxu0 0.0
    %1491 = vmatpush2.msra.mxu0 0.0
    %1492 = vmatprep.subr.mxu0 0.0
    %1493 = vmatpush2.msra.mxu0 0.0
    %1494 = vmatprep.subr.mxu0 0.0
    %1495 = vmatpush2.msra.mxu0 0.0
    %1496 = vmatprep.subr.mxu0 0.0
    %1497 = vmatpush2.msra.mxu0 0.0
    %1498 = vmatprep.subr.mxu0 0.0
    %1499 = vmatpush2.msra.mxu0 0.0
    %1500 = vmatprep.subr.mxu0 0.0
    %1501 = vmatpush2.msra.mxu0 0.0
    %1502 = vmatprep.subr.mxu0 0.0
    %1503 = vmatpush2.msra.mxu0 0.0
    %1504 = vmatprep.mubr.f32.mxu0 0.0
    %1505 = vmatmul.mubr.f32.gmra.mxu0 %v1391
    %v1506 = vpop.f32.mrf.mxu0
    %v1507 = vadd.f32 %v113, %v1506
    %v1508 = vpop.f32.mrf.mxu0
    %1509 = vmatprep.mubr.f32.mxu0 0.0
    %1510 = vmatmul.mubr.f32.gmra.mxu0 %v1392
    %v1511 = vpop.f32.mrf.mxu0
    %v1512 = vadd.f32 %v113, %v1511
    %v1513 = vpop.f32.mrf.mxu0
    %1514 = vmatprep.mubr.f32.mxu0 0.0
    %1515 = vmatmul.mubr.f32.gmra.mxu0 %v1393
    %v1516 = vpop.f32.mrf.mxu0
    %v1517 = vadd.f32 %v113, %v1516
    %v1518 = vpop.f32.mrf.mxu0
    %1519 = vmatprep.mubr.f32.mxu0 0.0
    %1520 = vmatmul.mubr.f32.gmra.mxu0 %v1394
    %v1521 = vpop.f32.mrf.mxu0
    %v1522 = vadd.f32 %v113, %v1521
    %v1523 = vpop.f32.mrf.mxu0
    %1524 = vmatprep.mubr.f32.mxu0 0.0
    %1525 = vmatmul.mubr.f32.gmra.mxu0 %v1395
    %v1526 = vpop.f32.mrf.mxu0
    %v1527 = vadd.f32 %v113, %v1526
    %v1528 = vpop.f32.mrf.mxu0
    %1529 = vmatprep.mubr.f32.mxu0 0.0
    %1530 = vmatmul.mubr.f32.gmra.mxu0 %v1396
    %v1531 = vpop.f32.mrf.mxu0
    %v1532 = vadd.f32 %v113, %v1531
    %v1533 = vpop.f32.mrf.mxu0
    %1534 = vmatprep.mubr.f32.mxu0 0.0
    %1535 = vmatmul.mubr.f32.gmra.mxu0 %v1397
    %v1536 = vpop.f32.mrf.mxu0
    %v1537 = vadd.f32 %v113, %v1536
    %v1538 = vpop.f32.mrf.mxu0
    %1539 = vmatprep.mubr.f32.mxu0 0.0
    %1540 = vmatmul.mubr.f32.gmra.mxu0 %v1398
    %v1541 = vpop.f32.mrf.mxu0
    %v1542 = vadd.f32 %v113, %v1541
    %v1543 = vpop.f32.mrf.mxu0
    %1544 = vmatprep.mubr.f32.mxu0 0.0
    %1545 = vmatmul.mubr.f32.gmra.mxu0 %v1399
    %v1546 = vpop.f32.mrf.mxu0
    %v1547 = vadd.f32 %v113, %v1546
    %v1548 = vpop.f32.mrf.mxu0
    %1549 = vmatprep.mubr.f32.mxu0 0.0
    %1550 = vmatmul.mubr.f32.gmra.mxu0 %v1400
    %v1551 = vpop.f32.mrf.mxu0
    %v1552 = vadd.f32 %v113, %v1551
    %v1553 = vpop.f32.mrf.mxu0
    %1554 = vmatprep.mubr.f32.mxu0 0.0
    %1555 = vmatmul.mubr.f32.gmra.mxu0 %v1401
    %v1556 = vpop.f32.mrf.mxu0
    %v1557 = vadd.f32 %v113, %v1556
    %v1558 = vpop.f32.mrf.mxu0
    %1559 = vmatprep.mubr.f32.mxu0 0.0
    %1560 = vmatmul.mubr.f32.gmra.mxu0 %v1402
    %v1561 = vpop.f32.mrf.mxu0
    %v1562 = vadd.f32 %v113, %v1561
    %v1563 = vpop.f32.mrf.mxu0
    %1564 = vmatprep.mubr.f32.mxu0 0.0
    %1565 = vmatmul.mubr.f32.gmra.mxu0 %v1403
    %v1566 = vpop.f32.mrf.mxu0
    %v1567 = vadd.f32 %v113, %v1566
    %v1568 = vpop.f32.mrf.mxu0
    %1569 = vmatprep.mubr.f32.mxu0 0.0
    %1570 = vmatmul.mubr.f32.gmra.mxu0 %v1404
    %v1571 = vpop.f32.mrf.mxu0
    %v1572 = vadd.f32 %v113, %v1571
    %v1573 = vpop.f32.mrf.mxu0
    %1574 = vmatprep.mubr.f32.mxu0 0.0
    %1575 = vmatmul.mubr.f32.gmra.mxu0 %v1405
    %v1576 = vpop.f32.mrf.mxu0
    %v1577 = vadd.f32 %v113, %v1576
    %v1578 = vpop.f32.mrf.mxu0
    %1579 = vmatprep.mubr.f32.mxu0 0.0
    %1580 = vmatmul.mubr.f32.gmra.mxu0 %v1406
    %v1581 = vpop.f32.mrf.mxu0
    %v1582 = vadd.f32 %v113, %v1581
    %v1583 = vpop.f32.mrf.mxu0
    %1584 = vmatprep.mubr.f32.mxu0 0.0
    %1585 = vmatmul.mubr.f32.gmra.mxu0 %v1407
    %v1586 = vpop.f32.mrf.mxu0
    %v1587 = vadd.f32 %v113, %v1586
    %v1588 = vpop.f32.mrf.mxu0
    %1589 = vmatprep.mubr.f32.mxu0 0.0
    %1590 = vmatmul.mubr.f32.gmra.mxu0 %v1408
    %v1591 = vpop.f32.mrf.mxu0
    %v1592 = vadd.f32 %v113, %v1591
    %v1593 = vpop.f32.mrf.mxu0
    %1594 = vmatprep.mubr.f32.mxu0 0.0
    %1595 = vmatmul.mubr.f32.gmra.mxu0 %v1409
    %v1596 = vpop.f32.mrf.mxu0
    %v1597 = vadd.f32 %v113, %v1596
    %v1598 = vpop.f32.mrf.mxu0
    %1599 = vmatprep.mubr.f32.mxu0 0.0
    %1600 = vmatmul.mubr.f32.gmra.mxu0 %v1410
    %v1601 = vpop.f32.mrf.mxu0
    %v1602 = vadd.f32 %v113, %v1601
    %v1603 = vpop.f32.mrf.mxu0
    %1604 = vmatprep.mubr.f32.mxu0 0.0
    %1605 = vmatmul.mubr.f32.gmra.mxu0 %v1411
    %v1606 = vpop.f32.mrf.mxu0
    %v1607 = vadd.f32 %v113, %v1606
    %v1608 = vpop.f32.mrf.mxu0
    %1609 = vmatprep.mubr.f32.mxu0 0.0
    %1610 = vmatmul.mubr.f32.gmra.mxu0 %v1412
    %v1611 = vpop.f32.mrf.mxu0
    %v1612 = vadd.f32 %v113, %v1611
    %v1613 = vpop.f32.mrf.mxu0
    %1614 = vmatprep.mubr.f32.mxu0 0.0
    %1615 = vmatmul.mubr.f32.gmra.mxu0 %v1413
    %v1616 = vpop.f32.mrf.mxu0
    %v1617 = vadd.f32 %v113, %v1616
    %v1618 = vpop.f32.mrf.mxu0
    %1619 = vmatprep.mubr.f32.mxu0 0.0
    %1620 = vmatmul.mubr.f32.gmra.mxu0 %v1414
    %v1621 = vpop.f32.mrf.mxu0
    %v1622 = vadd.f32 %v113, %v1621
    %v1623 = vpop.f32.mrf.mxu0
    %1624 = vmatprep.mubr.f32.mxu0 0.0
    %1625 = vmatmul.mubr.f32.gmra.mxu0 %v1415
    %v1626 = vpop.f32.mrf.mxu0
    %v1627 = vadd.f32 %v113, %v1626
    %v1628 = vpop.f32.mrf.mxu0
    %1629 = vmatprep.mubr.f32.mxu0 0.0
    %1630 = vmatmul.mubr.f32.gmra.mxu0 %v1416
    %v1631 = vpop.f32.mrf.mxu0
    %v1632 = vadd.f32 %v113, %v1631
    %v1633 = vpop.f32.mrf.mxu0
    %1634 = vmatprep.mubr.f32.mxu0 0.0
    %1635 = vmatmul.mubr.f32.gmra.mxu0 %v1417
    %v1636 = vpop.f32.mrf.mxu0
    %v1637 = vadd.f32 %v113, %v1636
    %v1638 = vpop.f32.mrf.mxu0
    %1639 = vmatprep.mubr.f32.mxu0 0.0
    %1640 = vmatmul.mubr.f32.gmra.mxu0 %v1418
    %v1641 = vpop.f32.mrf.mxu0
    %v1642 = vadd.f32 %v113, %v1641
    %v1643 = vpop.f32.mrf.mxu0
    %1644 = vmatprep.mubr.f32.mxu0 0.0
    %1645 = vmatmul.mubr.f32.gmra.mxu0 %v1419
    %v1646 = vpop.f32.mrf.mxu0
    %v1647 = vadd.f32 %v113, %v1646
    %v1648 = vpop.f32.mrf.mxu0
    %1649 = vmatprep.mubr.f32.mxu0 0.0
    %1650 = vmatmul.mubr.f32.gmra.mxu0 %v1420
    %v1651 = vpop.f32.mrf.mxu0
    %v1652 = vadd.f32 %v113, %v1651
    %v1653 = vpop.f32.mrf.mxu0
    %1654 = vmatprep.mubr.f32.mxu0 0.0
    %1655 = vmatmul.mubr.f32.gmra.mxu0 %v1421
    %v1656 = vpop.f32.mrf.mxu0
    %v1657 = vadd.f32 %v113, %v1656
    %v1658 = vpop.f32.mrf.mxu0
    %1659 = vmatprep.mubr.f32.mxu0 0.0
    %1660 = vmatmul.mubr.f32.gmra.mxu0 %v1422
    %v1661 = vpop.f32.mrf.mxu0
    %v1662 = vadd.f32 %v113, %v1661
    %v1663 = vpop.f32.mrf.mxu0
    %1664 = vmatprep.mubr.f32.mxu0 0.0
    %1665 = vmatmul.mubr.f32.gmra.mxu0 %v1423
    %v1666 = vpop.f32.mrf.mxu0
    %v1667 = vadd.f32 %v113, %v1666
    %v1668 = vpop.f32.mrf.mxu0
    %1669 = vmatprep.mubr.f32.mxu0 0.0
    %1670 = vmatmul.mubr.f32.gmra.mxu0 %v1424
    %v1671 = vpop.f32.mrf.mxu0
    %v1672 = vadd.f32 %v113, %v1671
    %v1673 = vpop.f32.mrf.mxu0
    %1674 = vmatprep.mubr.f32.mxu0 0.0
    %1675 = vmatmul.mubr.f32.gmra.mxu0 %v1425
    %v1676 = vpop.f32.mrf.mxu0
    %v1677 = vadd.f32 %v113, %v1676
    %v1678 = vpop.f32.mrf.mxu0
    %1679 = vmatprep.mubr.f32.mxu0 0.0
    %1680 = vmatmul.mubr.f32.gmra.mxu0 %v1426
    %v1681 = vpop.f32.mrf.mxu0
    %v1682 = vadd.f32 %v113, %v1681
    %v1683 = vpop.f32.mrf.mxu0
    %1684 = vmatprep.mubr.f32.mxu0 0.0
    %1685 = vmatmul.mubr.f32.gmra.mxu0 %v1427
    %v1686 = vpop.f32.mrf.mxu0
    %v1687 = vadd.f32 %v113, %v1686
    %v1688 = vpop.f32.mrf.mxu0
    %1689 = vmatprep.mubr.f32.mxu0 0.0
    %1690 = vmatmul.mubr.f32.gmra.mxu0 %v1428
    %v1691 = vpop.f32.mrf.mxu0
    %v1692 = vadd.f32 %v113, %v1691
    %v1693 = vpop.f32.mrf.mxu0
    %1694 = vmatprep.mubr.f32.mxu0 0.0
    %1695 = vmatmul.mubr.f32.gmra.mxu0 %v1429
    %v1696 = vpop.f32.mrf.mxu0
    %v1697 = vadd.f32 %v113, %v1696
    %v1698 = vpop.f32.mrf.mxu0
    %1699 = vmatprep.mubr.f32.mxu0 0.0
    %1700 = vmatmul.mubr.f32.gmra.mxu0 %v1430
    %v1701 = vpop.f32.mrf.mxu0
    %v1702 = vadd.f32 %v113, %v1701
    %v1703 = vpop.f32.mrf.mxu0
    %1704 = vmatprep.mubr.f32.mxu0 0.0
    %1705 = vmatmul.mubr.f32.gmra.mxu0 %v1431
    %v1706 = vpop.f32.mrf.mxu0
    %v1707 = vadd.f32 %v113, %v1706
    %v1708 = vpop.f32.mrf.mxu0
    %1709 = vmatprep.mubr.f32.mxu0 0.0
    %1710 = vmatmul.mubr.f32.gmra.mxu0 %v1432
    %v1711 = vpop.f32.mrf.mxu0
    %v1712 = vadd.f32 %v113, %v1711
    %v1713 = vpop.f32.mrf.mxu0
    %1714 = vmatprep.mubr.f32.mxu0 0.0
    %1715 = vmatmul.mubr.f32.gmra.mxu0 %v1433
    %v1716 = vpop.f32.mrf.mxu0
    %v1717 = vadd.f32 %v113, %v1716
    %v1718 = vpop.f32.mrf.mxu0
    %1719 = vmatprep.mubr.f32.mxu0 0.0
    %1720 = vmatmul.mubr.f32.gmra.mxu0 %v1434
    %v1721 = vpop.f32.mrf.mxu0
    %v1722 = vadd.f32 %v113, %v1721
    %v1723 = vpop.f32.mrf.mxu0
    %1724 = vmatprep.mubr.f32.mxu0 0.0
    %1725 = vmatmul.mubr.f32.gmra.mxu0 %v1435
    %v1726 = vpop.f32.mrf.mxu0
    %v1727 = vadd.f32 %v113, %v1726
    %v1728 = vpop.f32.mrf.mxu0
    %1729 = vmatprep.mubr.f32.mxu0 0.0
    %1730 = vmatmul.mubr.f32.gmra.mxu0 %v1436
    %v1731 = vpop.f32.mrf.mxu0
    %v1732 = vadd.f32 %v113, %v1731
    %v1733 = vpop.f32.mrf.mxu0
    %1734 = vmatprep.mubr.f32.mxu0 0.0
    %1735 = vmatmul.mubr.f32.gmra.mxu0 %v1437
    %v1736 = vpop.f32.mrf.mxu0
    %v1737 = vadd.f32 %v113, %v1736
    %v1738 = vpop.f32.mrf.mxu0
    %1739 = vmatprep.mubr.f32.mxu0 0.0
    %1740 = vmatmul.mubr.f32.gmra.mxu0 %v1438
    %v1741 = vpop.f32.mrf.mxu0
    %v1742 = vadd.f32 %v113, %v1741
    %v1743 = vpop.f32.mrf.mxu0
    %1744 = vmatprep.mubr.f32.mxu0 0.0
    %1745 = vmatmul.mubr.f32.gmra.mxu0 %v1439
    %v1746 = vpop.f32.mrf.mxu0
    %v1747 = vadd.f32 %v113, %v1746
    %v1748 = vpop.f32.mrf.mxu0
    %1749 = vdwg.mxu0
    %v1750 = vmax.f32 %v1507, 0.0
    %v1751 = vmax.f32 %v1512, 0.0
    %v1752 = vmax.f32 %v1517, 0.0
    %v1753 = vmax.f32 %v1522, 0.0
    %v1754 = vmax.f32 %v1527, 0.0
    %v1755 = vmax.f32 %v1532, 0.0
    %v1756 = vmax.f32 %v1537, 0.0
    %v1757 = vmax.f32 %v1542, 0.0
    %v1758 = vmax.f32 %v1547, 0.0
    %v1759 = vmax.f32 %v1552, 0.0
    %v1760 = vmax.f32 %v1557, 0.0
    %v1761 = vmax.f32 %v1562, 0.0
    %v1762 = vmax.f32 %v1567, 0.0
    %v1763 = vmax.f32 %v1572, 0.0
    %v1764 = vmax.f32 %v1577, 0.0
    %v1765 = vmax.f32 %v1582, 0.0
    %v1766 = vmax.f32 %v1587, 0.0
    %v1767 = vmax.f32 %v1592, 0.0
    %v1768 = vmax.f32 %v1597, 0.0
    %v1769 = vmax.f32 %v1602, 0.0
    %v1770 = vmax.f32 %v1607, 0.0
    %v1771 = vmax.f32 %v1612, 0.0
    %v1772 = vmax.f32 %v1617, 0.0
    %v1773 = vmax.f32 %v1622, 0.0
    %v1774 = vmax.f32 %v1627, 0.0
    %v1775 = vmax.f32 %v1632, 0.0
    %v1776 = vmax.f32 %v1637, 0.0
    %v1777 = vmax.f32 %v1642, 0.0
    %v1778 = vmax.f32 %v1647, 0.0
    %v1779 = vmax.f32 %v1652, 0.0
    %v1780 = vmax.f32 %v1657, 0.0
    %v1781 = vmax.f32 %v1662, 0.0
    %v1782 = vmax.f32 %v1667, 0.0
    %v1783 = vmax.f32 %v1672, 0.0
    %v1784 = vmax.f32 %v1677, 0.0
    %v1785 = vmax.f32 %v1682, 0.0
    %v1786 = vmax.f32 %v1687, 0.0
    %v1787 = vmax.f32 %v1692, 0.0
    %v1788 = vmax.f32 %v1697, 0.0
    %v1789 = vmax.f32 %v1702, 0.0
    %v1790 = vmax.f32 %v1707, 0.0
    %v1791 = vmax.f32 %v1712, 0.0
    %v1792 = vmax.f32 %v1717, 0.0
    %v1793 = vmax.f32 %v1722, 0.0
    %v1794 = vmax.f32 %v1727, 0.0
    %v1795 = vmax.f32 %v1732, 0.0
    %v1796 = vmax.f32 %v1737, 0.0
    %v1797 = vmax.f32 %v1742, 0.0
    %v1798 = vmax.f32 %v1747, 0.0
    %v1799 = vmax.f32 %v1341, %v1750
    %v1800 = vmax.f32 %v1342, %v1751
    %v1801 = vmax.f32 %v1343, %v1752
    %v1802 = vmax.f32 %v1344, %v1753
    %v1803 = vmax.f32 %v1345, %v1754
    %v1804 = vmax.f32 %v1346, %v1755
    %v1805 = vmax.f32 %v1347, %v1756
    %v1806 = vmax.f32 %v1348, %v1757
    %v1807 = vmax.f32 %v1349, %v1758
    %v1808 = vmax.f32 %v1350, %v1759
    %v1809 = vmax.f32 %v1351, %v1760
    %v1810 = vmax.f32 %v1352, %v1761
    %v1811 = vmax.f32 %v1353, %v1762
    %v1812 = vmax.f32 %v1354, %v1763
    %v1813 = vmax.f32 %v1355, %v1764
    %v1814 = vmax.f32 %v1356, %v1765
    %v1815 = vmax.f32 %v1357, %v1766
    %v1816 = vmax.f32 %v1358, %v1767
    %v1817 = vmax.f32 %v1359, %v1768
    %v1818 = vmax.f32 %v1360, %v1769
    %v1819 = vmax.f32 %v1361, %v1770
    %v1820 = vmax.f32 %v1362, %v1771
    %v1821 = vmax.f32 %v1363, %v1772
    %v1822 = vmax.f32 %v1364, %v1773
    %v1823 = vmax.f32 %v1365, %v1774
    %v1824 = vmax.f32 %v1366, %v1775
    %v1825 = vmax.f32 %v1367, %v1776
    %v1826 = vmax.f32 %v1368, %v1777
    %v1827 = vmax.f32 %v1369, %v1778
    %v1828 = vmax.f32 %v1370, %v1779
    %v1829 = vmax.f32 %v1371, %v1780
    %v1830 = vmax.f32 %v1372, %v1781
    %v1831 = vmax.f32 %v1373, %v1782
    %v1832 = vmax.f32 %v1374, %v1783
    %v1833 = vmax.f32 %v1375, %v1784
    %v1834 = vmax.f32 %v1376, %v1785
    %v1835 = vmax.f32 %v1377, %v1786
    %v1836 = vmax.f32 %v1378, %v1787
    %v1837 = vmax.f32 %v1379, %v1788
    %v1838 = vmax.f32 %v1380, %v1789
    %v1839 = vmax.f32 %v1381, %v1790
    %v1840 = vmax.f32 %v1382, %v1791
    %v1841 = vmax.f32 %v1383, %v1792
    %v1842 = vmax.f32 %v1384, %v1793
    %v1843 = vmax.f32 %v1385, %v1794
    %v1844 = vmax.f32 %v1386, %v1795
    %v1845 = vmax.f32 %v1387, %v1796
    %v1846 = vmax.f32 %v1388, %v1797
    %v1847 = vmax.f32 %v1389, %v1798
    %1848 = vst [vmem:[#allocation7] sm:$0xff] %v1799
    %1849 = vst [vmem:[#allocation7 + $0x8] sm:$0xff] %v1800
    %1850 = vst [vmem:[#allocation7 + $0x10] sm:$0xff] %v1801
    %1851 = vst [vmem:[#allocation7 + $0x18] sm:$0xff] %v1802
    %1852 = vst [vmem:[#allocation7 + $0x20] sm:$0xff] %v1803
    %1853 = vst [vmem:[#allocation7 + $0x28] sm:$0xff] %v1804
    %1854 = vst [vmem:[#allocation7 + $0x30] sm:$0xff] %v1805
    %1855 = vst [vmem:[#allocation7 + $0x38] sm:$0xff] %v1806
    %1856 = vst [vmem:[#allocation7 + $0x40] sm:$0xff] %v1807
    %1857 = vst [vmem:[#allocation7 + $0x48] sm:$0xff] %v1808
    %1858 = vst [vmem:[#allocation7 + $0x50] sm:$0xff] %v1809
    %1859 = vst [vmem:[#allocation7 + $0x58] sm:$0xff] %v1810
    %1860 = vst [vmem:[#allocation7 + $0x60] sm:$0xff] %v1811
    %1861 = vst [vmem:[#allocation7 + $0x68] sm:$0xff] %v1812
    %1862 = vst [vmem:[#allocation7 + $0x70] sm:$0xff] %v1813
    %1863 = vst [vmem:[#allocation7 + $0x78] sm:$0xff] %v1814
    %1864 = vst [vmem:[#allocation7 + $0x80] sm:$0xff] %v1815
    %1865 = vst [vmem:[#allocation7 + $0x88] sm:$0xff] %v1816
    %1866 = vst [vmem:[#allocation7 + $0x90] sm:$0xff] %v1817
    %1867 = vst [vmem:[#allocation7 + $0x98] sm:$0xff] %v1818
    %1868 = vst [vmem:[#allocation7 + $0xa0] sm:$0xff] %v1819
    %1869 = vst [vmem:[#allocation7 + $0xa8] sm:$0xff] %v1820
    %1870 = vst [vmem:[#allocation7 + $0xb0] sm:$0xff] %v1821
    %1871 = vst [vmem:[#allocation7 + $0xb8] sm:$0xff] %v1822
    %1872 = vst [vmem:[#allocation7 + $0xc0] sm:$0xff] %v1823
    %1873 = vst [vmem:[#allocation7 + $0xc8] sm:$0xff] %v1824
    %1874 = vst [vmem:[#allocation7 + $0xd0] sm:$0xff] %v1825
    %1875 = vst [vmem:[#allocation7 + $0xd8] sm:$0xff] %v1826
    %1876 = vst [vmem:[#allocation7 + $0xe0] sm:$0xff] %v1827
    %1877 = vst [vmem:[#allocation7 + $0xe8] sm:$0xff] %v1828
    %1878 = vst [vmem:[#allocation7 + $0xf0] sm:$0xff] %v1829
    %1879 = vst [vmem:[#allocation7 + $0xf8] sm:$0xff] %v1830
    %1880 = vst [vmem:[#allocation7 + $0x100] sm:$0xff] %v1831
    %1881 = vst [vmem:[#allocation7 + $0x108] sm:$0xff] %v1832
    %1882 = vst [vmem:[#allocation7 + $0x110] sm:$0xff] %v1833
    %1883 = vst [vmem:[#allocation7 + $0x118] sm:$0xff] %v1834
    %1884 = vst [vmem:[#allocation7 + $0x120] sm:$0xff] %v1835
    %1885 = vst [vmem:[#allocation7 + $0x128] sm:$0xff] %v1836
    %1886 = vst [vmem:[#allocation7 + $0x130] sm:$0xff] %v1837
    %1887 = vst [vmem:[#allocation7 + $0x138] sm:$0xff] %v1838
    %1888 = vst [vmem:[#allocation7 + $0x140] sm:$0xff] %v1839
    %1889 = vst [vmem:[#allocation7 + $0x148] sm:$0xff] %v1840
    %1890 = vst [vmem:[#allocation7 + $0x150] sm:$0xff] %v1841
    %1891 = vst [vmem:[#allocation7 + $0x158] sm:$0xff] %v1842
    %1892 = vst [vmem:[#allocation7 + $0x160] sm:$0xff] %v1843
    %1893 = vst [vmem:[#allocation7 + $0x168] sm:$0xff] %v1844
    %1894 = vst [vmem:[#allocation7 + $0x170] sm:$0xff] %v1845
    %1895 = vst [vmem:[#allocation7 + $0x178] sm:$0xff] %v1846
    %1896 = vst [vmem:[#allocation7 + $0x180] sm:$0xff] %v1847
    // Predicated region
    $region22: #{tpu_custom_call.1} parent=1 // pred_check
      _
    $region23: #{tpu_custom_call.1} parent=1 // pred_check_branch
      %1898 = sbr.rel (0) target = $region25
    $region24: #{tpu_custom_call.1} parent=1 // pred_region
      %s1900 = ssub.s32 6272, 6272
      %1901 = vsyncadd [#allocation4], %s1900
      %s1902 = sshll.u32 [#allocation7], 4
      %s1903 = int_to_ptr.vmem [resolvable:$true] %s1902
      %1908 = dma.vmem_to_hbm [thread:$0]  %s1903, 6272, %s3, [#allocation4], 128, 128, 8
    $region25: #{tpu_custom_call.1} parent=1 // pred_fallthru
      _
    // Predicated region
    $region26: #{tpu_custom_call.1} parent=1 // pred_check
      _
    $region27: #{tpu_custom_call.1} parent=1 // pred_check_branch
      %1910 = sbr.rel (0) target = $region29
    $region28: #{tpu_custom_call.1} parent=1 // pred_region
      %1911 = dma.done [#allocation4], 6272
    $region29: #{tpu_custom_call.1} parent=1 // pred_fallthru
      _
    %1912 = vsyncpa [#allocation3], 1
    %1913 = vsyncpa [#allocation6], 1
    %1914 = vsyncpa [#allocation4], 1

</llo_original>
